<compile_context>
chip_gen: v6e
topology: v6e:2x2x1
jax: 0.10.0
libtpu: 0.0.40
codegen_flags: <defaults>
</compile_context>

<pallas_src>
import jax
import jax.numpy as jnp
from jax.experimental import pallas as pl
from jax.experimental.pallas import tpu as pltpu


# ----------------------------------------------------------------------------
# Pass 1: fused phase-packed ConvTranspose matmul + BatchNorm batch statistics
# ----------------------------------------------------------------------------
def conv_stats_kernel(xp_ref, w_ref, b_ref, y_ref, ssum_ref, ssq_ref, patch_ref):
    # xp_ref   : (1, H+2, W+2, Cin)  bf16  NHWC image, spatially padded by 1
    # w_ref    : (9*Cin, 4*Cout)     bf16  zero-padded phase-packed weights
    # b_ref    : (1, 4*Cout)         f32   conv bias tiled over the 4 phases
    # y_ref    : (1, H*W, 4*Cout)    f32   pre-BN conv output slab (this image)
    # ssum_ref : (1, 4*Cout)         f32   running sum   (revisited accumulator)
    # ssq_ref  : (1, 4*Cout)         f32   running sum^2 (revisited accumulator)
    # patch_ref: (H*W, 9*Cin)        bf16  im2col scratch (VMEM)
    n = pl.program_id(0)
    _, Hp, Wp, Cin = xp_ref.shape
    H, W = Hp - 2, Wp - 2
    HW = H * W

    @pl.when(n == 0)
    def _():
        ssum_ref[...] = jnp.zeros_like(ssum_ref)
        ssq_ref[...] = jnp.zeros_like(ssq_ref)

    # Single im2col scratch: the 9 shifted (H, W, Cin) views of the padded
    # image packed along the lane axis, built once and reused by one fused
    # MXU matmul (no per-phase concatenations).
    xp = xp_ref[0]                                           # (Hp, Wp, Cin)
    for k in range(9):
        sy, sx = k // 3, k % 3
        patch_ref[:, k * Cin:(k + 1) * Cin] = (
            xp[sy:sy + H, sx:sx + W, :].reshape(HW, Cin))

    # One (HW, 9*Cin) @ (9*Cin, 4*Cout) matmul: bf16 operands, f32 accumulate.
    y = jnp.dot(patch_ref[...], w_ref[...],
                preferred_element_type=jnp.float32) + b_ref[...]

    # BatchNorm batch statistics, accumulated across grid steps.
    ssum_ref[...] += jnp.sum(y, axis=0, keepdims=True)
    ssq_ref[...] += jnp.sum(y * y, axis=0, keepdims=True)

    y_ref[...] = y.reshape(1, HW, y.shape[-1])


# ----------------------------------------------------------------------------
# Pass 2: BN affine + SiLU + SE (pool -> FCs -> gate), one sweep per image
# ----------------------------------------------------------------------------
def bn_silu_se_kernel(y_ref, scale_ref, shift_ref, w1p_ref, w2p_ref, o_ref):
    # y_ref     : (1, H*W, 4*Cout) f32  pre-BN conv output for one image
    # scale_ref : (1, 4*Cout)      f32  BN scale, tiled over the 4 phases
    # shift_ref : (1, 4*Cout)      f32  BN shift, tiled over the 4 phases
    # w1p_ref   : (4*Cout, Cr)     f32  SE fc1, phase-tiled, folds 1/(4*H*W)
    # w2p_ref   : (Cr, 4*Cout)     f32  SE fc2, phase-tiled
    # o_ref     : (1, H*W, 4*Cout) f32  gated output slab
    a = y_ref[...] * scale_ref[...][:, None, :] + shift_ref[...][:, None, :]
    act = a * jax.nn.sigmoid(a)                                   # SiLU
    pooled = jnp.sum(act[0], axis=0, keepdims=True)               # (1, 4*Cout)
    # SE FCs (Cout -> Cout//16 -> Cout) on the VPU: broadcast-multiply + reduce.
    # The phase reduction of the global-average pool is folded into the tiled
    # w1p rows, so no cross-lane relayout is needed.
    h = jnp.maximum(
        jnp.sum(pooled[:, :, None] * w1p_ref[...][None, :, :], axis=1), 0.0)
    gate = jax.nn.sigmoid(
        jnp.sum(h[:, :, None] * w2p_ref[...][None, :, :], axis=1))  # (1, 4*Cout)
    o_ref[...] = act * gate[:, None, :]


# ----------------------------------------------------------------------------
# Wrapper: layout prep, phase-weight packing, two pallas_calls, de-interleave
# ----------------------------------------------------------------------------
def _vmem_limit_bytes():
    # ~75% of physical VMEM (128 MiB on v5e/v6e, 64 MiB on v7x), leaving
    # headroom for Mosaic internal scratch and the double-buffered blocks.
    try:
        cap = int(pltpu.get_tpu_info().vmem_capacity_bytes)
    except Exception:
        cap = 64 * 2**20
    return (cap * 3) // 4


@jax.jit
def decoder_block(x_nchw, wt, bias, gamma, beta, w1, w2):
    N, Cin, H, W = x_nchw.shape
    Cout = wt.shape[1]
    Cr = w1.shape[1]
    HW = H * W
    C4 = 4 * Cout

    # ---- layout prep (tiny / O(input) XLA ops) -------------------------------
    # NCHW -> NHWC, pad the ORIGINAL (undilated) input by 1; bf16 MXU operand.
    x = jnp.transpose(x_nchw, (0, 2, 3, 1)).astype(jnp.float32)
    xp = jnp.pad(x, ((0, 0), (1, 1), (1, 1), (0, 0))).astype(jnp.bfloat16)

    # Zero-padded phase-packed weights: row (sy*3 + sx)*Cin + i, col p*Cout + o.
    # For output parity (py, px) and tap (dy, dx), (sy, sx) = (py+dy, px+dx):
    #   out[n, o, 2yo+py, 2xo+px] += xp[n, yo+sy, xo+sx, i]
    #                                 * Wt[i, o, 3-py-2dy, 3-px-2dx]
    wfull = jnp.zeros((3, 3, Cin, 4, Cout), jnp.float32)
    for py in range(2):
        for px in range(2):
            p = 2 * py + px
            for dy in range(2):
                for dx in range(2):
                    wfull = wfull.at[py + dy, px + dx, :, p, :].set(
                        wt[:, :, 3 - py - 2 * dy, 3 - px - 2 * dx])
    wpack = wfull.reshape(9 * Cin, C4).astype(jnp.bfloat16)

    b4 = jnp.tile(bias.astype(jnp.float32), 4).reshape(1, C4)

    vmem_limit = _vmem_limit_bytes()

    # ---- pass 1: conv + BN stats (grid over batch, sequential accumulation) --
    # TODO(synk): for large H*W additionally tile the spatial axis (overlapping
    # input rows via pl.Element / manual DMA) so a single image need not fit.
    y_slab, ssum, ssq = pl.pallas_call(
        conv_stats_kernel,
        out_shape=(jax.ShapeDtypeStruct((N, HW, C4), jnp.float32),
                   jax.ShapeDtypeStruct((1, C4), jnp.float32),
                   jax.ShapeDtypeStruct((1, C4), jnp.float32)),
        grid=(N,),
        in_specs=[pl.BlockSpec((1, H + 2, W + 2, Cin), lambda n: (n, 0, 0, 0)),
                  pl.BlockSpec((9 * Cin, C4), lambda n: (0, 0)),
                  pl.BlockSpec((1, C4), lambda n: (0, 0))],
        out_specs=(pl.BlockSpec((1, HW, C4), lambda n: (n, 0, 0)),
                   pl.BlockSpec((1, C4), lambda n: (0, 0)),
                   pl.BlockSpec((1, C4), lambda n: (0, 0))),
        scratch_shapes=[pltpu.VMEM((HW, 9 * Cin), jnp.bfloat16)],
        compiler_params=pltpu.CompilerParams(
            dimension_semantics=("arbitrary",),
            vmem_limit_bytes=vmem_limit),
    )(xp, wpack, b4)

    # ---- tiny XLA glue: fold phase-wise stats into per-channel scale/shift ---
    cnt = float(N * 4 * H * W)
    ssum_c = jnp.sum(ssum.reshape(4, Cout), axis=0)
    ssq_c = jnp.sum(ssq.reshape(4, Cout), axis=0)
    mean = ssum_c / cnt
    # TODO(synk): single-pass E[y^2]-E[y]^2 can cancel for large-|mean| channels;
    # switch to a centered second pass if production stats quality demands it.
    var = jnp.maximum(ssq_c / cnt - mean * mean, 0.0)
    scale = gamma.astype(jnp.float32) * jax.lax.rsqrt(var + 1e-5)
    shift = beta.astype(jnp.float32) - mean * scale
    scale4 = jnp.tile(scale, 4).reshape(1, C4)
    shift4 = jnp.tile(shift, 4).reshape(1, C4)

    # SE FC weights pre-tiled to the phase-packed lane layout; w1p folds in the
    # 1/(4*H*W) global-average-pool normalization (summing the tiled rows ==
    # summing over phases), so the kernel needs no cross-lane phase reduction.
    w1p = jnp.tile(w1.astype(jnp.float32), (4, 1)) * (1.0 / float(4 * H * W))
    w2p = jnp.tile(w2.astype(jnp.float32), (1, 4))

    # ---- pass 2: BN affine + SiLU + SE (independent per image -> "parallel") -
    out_slab = pl.pallas_call(
        bn_silu_se_kernel,
        out_shape=jax.ShapeDtypeStruct((N, HW, C4), jnp.float32),
        grid=(N,),
        in_specs=[pl.BlockSpec((1, HW, C4), lambda n: (n, 0, 0)),
                  pl.BlockSpec((1, C4), lambda n: (0, 0)),
                  pl.BlockSpec((1, C4), lambda n: (0, 0)),
                  pl.BlockSpec((C4, Cr), lambda n: (0, 0)),
                  pl.BlockSpec((Cr, C4), lambda n: (0, 0))],
        out_specs=pl.BlockSpec((1, HW, C4), lambda n: (n, 0, 0)),
        compiler_params=pltpu.CompilerParams(
            dimension_semantics=("parallel",),
            vmem_limit_bytes=vmem_limit),
    )(y_slab, scale4, shift4, w1p, w2p)

    # ---- de-interleave the 4 parity phases -> NCHW (single transpose) --------
    # TODO(synk): a consumer accepting NHWC / the phase-slab layout would skip
    # this extra HBM read+write entirely.
    out = out_slab.reshape(N, H, W, 2, 2, Cout)
    out = jnp.transpose(out, (0, 5, 1, 3, 2, 4)).reshape(N, Cout, 2 * H, 2 * W)
    return out


# ----------------------------------------------------------------------------
# Pure-JAX reference (correctness sanity check)
# ----------------------------------------------------------------------------
def decoder_block_ref(x_nchw, wt, bias, gamma, beta, w1, w2):
    w_conv = jnp.transpose(jnp.flip(wt, axis=(2, 3)), (1, 0, 2, 3))  # (Cout,Cin,4,4)
    y = jax.lax.conv_general_dilated(
        x_nchw, w_conv, window_strides=(1, 1), padding=[(2, 2), (2, 2)],
        lhs_dilation=(2, 2),
        dimension_numbers=("NCHW", "OIHW", "NCHW"))
    y = y + bias[None, :, None, None]
    mean = jnp.mean(y, axis=(0, 2, 3), keepdims=True)
    var = jnp.mean((y - mean) ** 2, axis=(0, 2, 3), keepdims=True)
    y = (y - mean) / jnp.sqrt(var + 1e-5)
    y = y * gamma[None, :, None, None] + beta[None, :, None, None]
    y = y * jax.nn.sigmoid(y)
    pooled = jnp.mean(y, axis=(2, 3))
    s = jax.nn.sigmoid(jnp.maximum(pooled @ w1, 0.0) @ w2)
    return y * s[:, :, None, None]


if __name__ == "__main__":
    # DecoderBlock(in_channels=8, out_channels=16), input (N=2, 8, 8, 8) NCHW.
    N, Cin, H, W = 2, 8, 8, 8
    Cout = 16
    reduction = 16
    Cr = Cout // reduction  # = 1

    key = jax.random.PRNGKey(0)
    k_x, k_wt, k_b, k_w1, k_w2 = jax.random.split(key, 5)

    x = jax.random.normal(k_x, (N, Cin, H, W), jnp.float32)

    # Deterministic synthetic parameters (shapes follow the PyTorch module).
    wt = 0.1 * jax.random.normal(k_wt, (Cin, Cout, 4, 4), jnp.float32)   # ConvTranspose2d.weight
    bias = 0.1 * jax.random.normal(k_b, (Cout,), jnp.float32)            # ConvTranspose2d.bias
    gamma = jnp.ones((Cout,), jnp.float32)                               # BatchNorm2d.weight
    beta = jnp.zeros((Cout,), jnp.float32)                               # BatchNorm2d.bias
    w1 = 0.2 * jax.random.normal(k_w1, (Cout, Cr), jnp.float32)          # SE fc1 (no bias)
    w2 = 0.2 * jax.random.normal(k_w2, (Cr, Cout), jnp.float32)          # SE fc2 (no bias)

    out = decoder_block(x, wt, bias, gamma, beta, w1, w2)
    out = jax.block_until_ready(out)

    ref = decoder_block_ref(x, wt, bias, gamma, beta, w1, w2)
    ref = jax.block_until_ready(ref)

    assert out.shape == (N, Cout, 2 * H, 2 * W), out.shape
    # Tolerance re-validated for bf16 MXU operands (f32 reference): conv-output
    # quantization error propagated through BN/SiLU/SE stays well under 5e-2.
    max_err = float(jnp.max(jnp.abs(out - ref)))
    assert max_err < 5e-2, f"max abs error {max_err}"

    print("KERNEL_OK")
</pallas_src>

<mosaic_0001>
module attributes {stable_mosaic.version = 11 : i64} {
  func.func @conv_stats_kernel(%arg0: i32, %arg1: memref<1x10x10x8xbf16, #tpu.memory_space<vmem>>, %arg2: memref<72x64xbf16, #tpu.memory_space<vmem>>, %arg3: memref<1x64xf32, #tpu.memory_space<vmem>>, %arg4: memref<1x64x64xf32, #tpu.memory_space<vmem>>, %arg5: memref<1x64xf32, #tpu.memory_space<vmem>>, %arg6: memref<1x64xf32, #tpu.memory_space<vmem>>, %arg7: memref<64x72xbf16, #tpu.memory_space<vmem>>) attributes {dimension_semantics = [#tpu.dimension_semantics<arbitrary>], iteration_bounds = array<i64: 2>, scalar_prefetch = 0 : i64, scratch_operands = 1 : i64, tpu.core_type = #tpu.core_type<tc>, window_params = [{transform_indices = @transform_0, window_bounds = array<i64: 1, 10, 10, 8>}, {pipeline_mode = #tpu.pipeline_mode<synchronous>, transform_indices = @transform_1, window_bounds = array<i64: 72, 64>}, {pipeline_mode = #tpu.pipeline_mode<synchronous>, transform_indices = @transform_2, window_bounds = array<i64: 1, 64>}, {transform_indices = @transform_3, window_bounds = array<i64: 1, 64, 64>}, {pipeline_mode = #tpu.pipeline_mode<synchronous>, transform_indices = @transform_4, window_bounds = array<i64: 1, 64>}, {pipeline_mode = #tpu.pipeline_mode<synchronous>, transform_indices = @transform_5, window_bounds = array<i64: 1, 64>}]} {
    %c0_i32 = arith.constant 0 : i32
    %0 = arith.cmpi eq, %arg0, %c0_i32 : i32
    %1 = arith.extui %0 : i1 to i32
    %c0_i32_0 = arith.constant 0 : i32
    %2 = arith.cmpi ne, %1, %c0_i32_0 : i32
    scf.if %2 {
      %cst_33 = arith.constant 0.000000e+00 : f32
      %51 = vector.broadcast %cst_33 : f32 to vector<1x64xf32>
      %c0_34 = arith.constant 0 : index
      %c0_35 = arith.constant 0 : index
      %52 = vector.load %arg5[%c0_34, %c0_35] : memref<1x64xf32, #tpu.memory_space<vmem>>, vector<1x64xf32>
      tpu.vector_store %arg5[%c0_34, %c0_35], %51 {strides = array<i32>} : memref<1x64xf32, #tpu.memory_space<vmem>>, vector<1x64xf32>,
      %cst_36 = arith.constant 0.000000e+00 : f32
      %53 = vector.broadcast %cst_36 : f32 to vector<1x64xf32>
      %c0_37 = arith.constant 0 : index
      %c0_38 = arith.constant 0 : index
      %54 = vector.load %arg6[%c0_37, %c0_38] : memref<1x64xf32, #tpu.memory_space<vmem>>, vector<1x64xf32>
      tpu.vector_store %arg6[%c0_37, %c0_38], %53 {strides = array<i32>} : memref<1x64xf32, #tpu.memory_space<vmem>>, vector<1x64xf32>,
    } else {
    }
    %c0 = arith.constant 0 : index
    %c0_1 = arith.constant 0 : index
    %c0_2 = arith.constant 0 : index
    %c0_3 = arith.constant 0 : index
    %3 = vector.load %arg1[%c0, %c0_1, %c0_2, %c0_3] : memref<1x10x10x8xbf16, #tpu.memory_space<vmem>>, vector<1x10x10x8xbf16>
    %4 = vector.shape_cast %3 : vector<1x10x10x8xbf16> to vector<10x10x8xbf16>
    %5 = vector.extract_strided_slice %4 {offsets = [0, 0, 0], sizes = [8, 8, 8], strides = [1, 1, 1]} : vector<10x10x8xbf16> to vector<8x8x8xbf16>
    %6 = vector.shape_cast %5 : vector<8x8x8xbf16> to vector<64x8xbf16>
    %c0_4 = arith.constant 0 : index
    %c0_5 = arith.constant 0 : index
    %7 = vector.load %arg7[%c0_4, %c0_5] : memref<64x72xbf16, #tpu.memory_space<vmem>>, vector<64x8xbf16>
    tpu.vector_store %arg7[%c0_4, %c0_5], %6 {strides = array<i32>} : memref<64x72xbf16, #tpu.memory_space<vmem>>, vector<64x8xbf16>,
    %8 = vector.extract_strided_slice %4 {offsets = [0, 1, 0], sizes = [8, 8, 8], strides = [1, 1, 1]} : vector<10x10x8xbf16> to vector<8x8x8xbf16>
    %9 = vector.shape_cast %8 : vector<8x8x8xbf16> to vector<64x8xbf16>
    %c0_6 = arith.constant 0 : index
    %c8 = arith.constant 8 : index
    %10 = vector.load %arg7[%c0_6, %c8] : memref<64x72xbf16, #tpu.memory_space<vmem>>, vector<64x8xbf16>
    tpu.vector_store %arg7[%c0_6, %c8], %9 {strides = array<i32>} : memref<64x72xbf16, #tpu.memory_space<vmem>>, vector<64x8xbf16>,
    %11 = vector.extract_strided_slice %4 {offsets = [0, 2, 0], sizes = [8, 8, 8], strides = [1, 1, 1]} : vector<10x10x8xbf16> to vector<8x8x8xbf16>
    %12 = vector.shape_cast %11 : vector<8x8x8xbf16> to vector<64x8xbf16>
    %c0_7 = arith.constant 0 : index
    %c16 = arith.constant 16 : index
    %13 = vector.load %arg7[%c0_7, %c16] : memref<64x72xbf16, #tpu.memory_space<vmem>>, vector<64x8xbf16>
    tpu.vector_store %arg7[%c0_7, %c16], %12 {strides = array<i32>} : memref<64x72xbf16, #tpu.memory_space<vmem>>, vector<64x8xbf16>,
    %14 = vector.extract_strided_slice %4 {offsets = [1, 0, 0], sizes = [8, 8, 8], strides = [1, 1, 1]} : vector<10x10x8xbf16> to vector<8x8x8xbf16>
    %15 = vector.shape_cast %14 : vector<8x8x8xbf16> to vector<64x8xbf16>
    %c0_8 = arith.constant 0 : index
    %c24 = arith.constant 24 : index
    %16 = vector.load %arg7[%c0_8, %c24] : memref<64x72xbf16, #tpu.memory_space<vmem>>, vector<64x8xbf16>
    tpu.vector_store %arg7[%c0_8, %c24], %15 {strides = array<i32>} : memref<64x72xbf16, #tpu.memory_space<vmem>>, vector<64x8xbf16>,
    %17 = vector.extract_strided_slice %4 {offsets = [1, 1, 0], sizes = [8, 8, 8], strides = [1, 1, 1]} : vector<10x10x8xbf16> to vector<8x8x8xbf16>
    %18 = vector.shape_cast %17 : vector<8x8x8xbf16> to vector<64x8xbf16>
    %c0_9 = arith.constant 0 : index
    %c32 = arith.constant 32 : index
    %19 = vector.load %arg7[%c0_9, %c32] : memref<64x72xbf16, #tpu.memory_space<vmem>>, vector<64x8xbf16>
    tpu.vector_store %arg7[%c0_9, %c32], %18 {strides = array<i32>} : memref<64x72xbf16, #tpu.memory_space<vmem>>, vector<64x8xbf16>,
    %20 = vector.extract_strided_slice %4 {offsets = [1, 2, 0], sizes = [8, 8, 8], strides = [1, 1, 1]} : vector<10x10x8xbf16> to vector<8x8x8xbf16>
    %21 = vector.shape_cast %20 : vector<8x8x8xbf16> to vector<64x8xbf16>
    %c0_10 = arith.constant 0 : index
    %c40 = arith.constant 40 : index
    %22 = vector.load %arg7[%c0_10, %c40] : memref<64x72xbf16, #tpu.memory_space<vmem>>, vector<64x8xbf16>
    tpu.vector_store %arg7[%c0_10, %c40], %21 {strides = array<i32>} : memref<64x72xbf16, #tpu.memory_space<vmem>>, vector<64x8xbf16>,
    %23 = vector.extract_strided_slice %4 {offsets = [2, 0, 0], sizes = [8, 8, 8], strides = [1, 1, 1]} : vector<10x10x8xbf16> to vector<8x8x8xbf16>
    %24 = vector.shape_cast %23 : vector<8x8x8xbf16> to vector<64x8xbf16>
    %c0_11 = arith.constant 0 : index
    %c48 = arith.constant 48 : index
    %25 = vector.load %arg7[%c0_11, %c48] : memref<64x72xbf16, #tpu.memory_space<vmem>>, vector<64x8xbf16>
    tpu.vector_store %arg7[%c0_11, %c48], %24 {strides = array<i32>} : memref<64x72xbf16, #tpu.memory_space<vmem>>, vector<64x8xbf16>,
    %26 = vector.extract_strided_slice %4 {offsets = [2, 1, 0], sizes = [8, 8, 8], strides = [1, 1, 1]} : vector<10x10x8xbf16> to vector<8x8x8xbf16>
    %27 = vector.shape_cast %26 : vector<8x8x8xbf16> to vector<64x8xbf16>
    %c0_12 = arith.constant 0 : index
    %c56 = arith.constant 56 : index
    %28 = vector.load %arg7[%c0_12, %c56] : memref<64x72xbf16, #tpu.memory_space<vmem>>, vector<64x8xbf16>
    tpu.vector_store %arg7[%c0_12, %c56], %27 {strides = array<i32>} : memref<64x72xbf16, #tpu.memory_space<vmem>>, vector<64x8xbf16>,
    %29 = vector.extract_strided_slice %4 {offsets = [2, 2, 0], sizes = [8, 8, 8], strides = [1, 1, 1]} : vector<10x10x8xbf16> to vector<8x8x8xbf16>
    %30 = vector.shape_cast %29 : vector<8x8x8xbf16> to vector<64x8xbf16>
    %c0_13 = arith.constant 0 : index
    %c64 = arith.constant 64 : index
    %31 = vector.load %arg7[%c0_13, %c64] : memref<64x72xbf16, #tpu.memory_space<vmem>>, vector<64x8xbf16>
    tpu.vector_store %arg7[%c0_13, %c64], %30 {strides = array<i32>} : memref<64x72xbf16, #tpu.memory_space<vmem>>, vector<64x8xbf16>,
    %c0_14 = arith.constant 0 : index
    %c0_15 = arith.constant 0 : index
    %32 = vector.load %arg7[%c0_14, %c0_15] : memref<64x72xbf16, #tpu.memory_space<vmem>>, vector<64x72xbf16>
    %c0_16 = arith.constant 0 : index
    %c0_17 = arith.constant 0 : index
    %33 = vector.load %arg2[%c0_16, %c0_17] : memref<72x64xbf16, #tpu.memory_space<vmem>>, vector<72x64xbf16>
    %cst = arith.constant dense<0.000000e+00> : vector<64x64xf32>
    %34 = tpu.matmul %32, %33, %cst {dimension_numbers = #tpu.dot_dimension_numbers<[1], [0], [0], [1], [0, 0, 1, 1], [], []>} : vector<64x72xbf16>, vector<72x64xbf16>, vector<64x64xf32> -> vector<64x64xf32>
    %c0_18 = arith.constant 0 : index
    %c0_19 = arith.constant 0 : index
    %35 = vector.load %arg3[%c0_18, %c0_19] : memref<1x64xf32, #tpu.memory_space<vmem>>, vector<1x64xf32>
    %36 = vector.broadcast %35 : vector<1x64xf32> to vector<64x64xf32>
    %37 = arith.addf %34, %36 : vector<64x64xf32>
    %c0_20 = arith.constant 0 : index
    %c0_21 = arith.constant 0 : index
    %38 = vector.load %arg5[%c0_20, %c0_21] : memref<1x64xf32, #tpu.memory_space<vmem>>, vector<1x64xf32>
    %cst_22 = arith.constant dense<0.000000e+00> : vector<64xf32>
    %39 = vector.multi_reduction <add>, %37, %cst_22 [0] : vector<64x64xf32> to vector<64xf32>
    %40 = vector.shape_cast %39 : vector<64xf32> to vector<1x64xf32>
    %41 = arith.addf %38, %40 : vector<1x64xf32>
    %c0_23 = arith.constant 0 : index
    %c0_24 = arith.constant 0 : index
    %42 = vector.load %arg5[%c0_23, %c0_24] : memref<1x64xf32, #tpu.memory_space<vmem>>, vector<1x64xf32>
    tpu.vector_store %arg5[%c0_23, %c0_24], %41 {strides = array<i32>} : memref<1x64xf32, #tpu.memory_space<vmem>>, vector<1x64xf32>,
    %c0_25 = arith.constant 0 : index
    %c0_26 = arith.constant 0 : index
    %43 = vector.load %arg6[%c0_25, %c0_26] : memref<1x64xf32, #tpu.memory_space<vmem>>, vector<1x64xf32>
    %44 = arith.mulf %37, %37 : vector<64x64xf32>
    %cst_27 = arith.constant dense<0.000000e+00> : vector<64xf32>
    %45 = vector.multi_reduction <add>, %44, %cst_27 [0] : vector<64x64xf32> to vector<64xf32>
    %46 = vector.shape_cast %45 : vector<64xf32> to vector<1x64xf32>
    %47 = arith.addf %43, %46 : vector<1x64xf32>
    %c0_28 = arith.constant 0 : index
    %c0_29 = arith.constant 0 : index
    %48 = vector.load %arg6[%c0_28, %c0_29] : memref<1x64xf32, #tpu.memory_space<vmem>>, vector<1x64xf32>
    tpu.vector_store %arg6[%c0_28, %c0_29], %47 {strides = array<i32>} : memref<1x64xf32, #tpu.memory_space<vmem>>, vector<1x64xf32>,
    %49 = vector.shape_cast %37 : vector<64x64xf32> to vector<1x64x64xf32>
    %c0_30 = arith.constant 0 : index
    %c0_31 = arith.constant 0 : index
    %c0_32 = arith.constant 0 : index
    %50 = vector.load %arg4[%c0_30, %c0_31, %c0_32] : memref<1x64x64xf32, #tpu.memory_space<vmem>>, vector<1x64x64xf32>
    tpu.vector_store %arg4[%c0_30, %c0_31, %c0_32], %49 {strides = array<i32>} : memref<1x64x64xf32, #tpu.memory_space<vmem>>, vector<1x64x64xf32>,
    return
  }
  func.func @transform_0(%arg0: i32) -> (i32, i32, i32, i32) {
    %c0_i32 = arith.constant 0 : i32
    %c0_i32_0 = arith.constant 0 : i32
    %c0_i32_1 = arith.constant 0 : i32
    %c0_i32_2 = arith.constant 0 : i32
    return %arg0, %c0_i32, %c0_i32_0, %c0_i32_1 : i32, i32, i32, i32
  }
  func.func @transform_1(%arg0: i32) -> (i32, i32) {
    %c0_i32 = arith.constant 0 : i32
    %c0_i32_0 = arith.constant 0 : i32
    %c0_i32_1 = arith.constant 0 : i32
    return %c0_i32, %c0_i32_0 : i32, i32
  }
  func.func @transform_2(%arg0: i32) -> (i32, i32) {
    %c0_i32 = arith.constant 0 : i32
    %c0_i32_0 = arith.constant 0 : i32
    %c0_i32_1 = arith.constant 0 : i32
    return %c0_i32, %c0_i32_0 : i32, i32
  }
  func.func @transform_3(%arg0: i32) -> (i32, i32, i32) {
    %c0_i32 = arith.constant 0 : i32
    %c0_i32_0 = arith.constant 0 : i32
    %c0_i32_1 = arith.constant 0 : i32
    return %arg0, %c0_i32, %c0_i32_0 : i32, i32, i32
  }
  func.func @transform_4(%arg0: i32) -> (i32, i32) {
    %c0_i32 = arith.constant 0 : i32
    %c0_i32_0 = arith.constant 0 : i32
    %c0_i32_1 = arith.constant 0 : i32
    return %c0_i32, %c0_i32_0 : i32, i32
  }
  func.func @transform_5(%arg0: i32) -> (i32, i32) {
    %c0_i32 = arith.constant 0 : i32
    %c0_i32_0 = arith.constant 0 : i32
    %c0_i32_1 = arith.constant 0 : i32
    return %c0_i32, %c0_i32_0 : i32, i32
  }
}

module attributes {stable_mosaic.version = 11 : i64} {
  func.func @bn_silu_se_kernel(%arg0: i32, %arg1: memref<1x64x64xf32, #tpu.memory_space<vmem>>, %arg2: memref<1x64xf32, #tpu.memory_space<vmem>>, %arg3: memref<1x64xf32, #tpu.memory_space<vmem>>, %arg4: memref<64x1xf32, #tpu.memory_space<vmem>>, %arg5: memref<1x64xf32, #tpu.memory_space<vmem>>, %arg6: memref<1x64x64xf32, #tpu.memory_space<vmem>>) attributes {dimension_semantics = [#tpu.dimension_semantics<parallel>], iteration_bounds = array<i64: 2>, scalar_prefetch = 0 : i64, scratch_operands = 0 : i64, tpu.core_type = #tpu.core_type<tc>, window_params = [{transform_indices = @transform_0, window_bounds = array<i64: 1, 64, 64>}, {pipeline_mode = #tpu.pipeline_mode<synchronous>, transform_indices = @transform_1, window_bounds = array<i64: 1, 64>}, {pipeline_mode = #tpu.pipeline_mode<synchronous>, transform_indices = @transform_2, window_bounds = array<i64: 1, 64>}, {pipeline_mode = #tpu.pipeline_mode<synchronous>, transform_indices = @transform_3, window_bounds = array<i64: 64, 1>}, {pipeline_mode = #tpu.pipeline_mode<synchronous>, transform_indices = @transform_4, window_bounds = array<i64: 1, 64>}, {transform_indices = @transform_5, window_bounds = array<i64: 1, 64, 64>}]} {
    %c0 = arith.constant 0 : index
    %c0_0 = arith.constant 0 : index
    %c0_1 = arith.constant 0 : index
    %0 = vector.load %arg1[%c0, %c0_0, %c0_1] : memref<1x64x64xf32, #tpu.memory_space<vmem>>, vector<1x64x64xf32>
    %c0_2 = arith.constant 0 : index
    %c0_3 = arith.constant 0 : index
    %1 = vector.load %arg2[%c0_2, %c0_3] : memref<1x64xf32, #tpu.memory_space<vmem>>, vector<1x64xf32>
    %2 = vector.shape_cast %1 : vector<1x64xf32> to vector<1x1x64xf32>
    %3 = vector.broadcast %2 : vector<1x1x64xf32> to vector<1x64x64xf32>
    %4 = arith.mulf %0, %3 : vector<1x64x64xf32>
    %c0_4 = arith.constant 0 : index
    %c0_5 = arith.constant 0 : index
    %5 = vector.load %arg3[%c0_4, %c0_5] : memref<1x64xf32, #tpu.memory_space<vmem>>, vector<1x64xf32>
    %6 = vector.shape_cast %5 : vector<1x64xf32> to vector<1x1x64xf32>
    %7 = vector.broadcast %6 : vector<1x1x64xf32> to vector<1x64x64xf32>
    %8 = arith.addf %4, %7 : vector<1x64x64xf32>
    %9 = arith.negf %8 : vector<1x64x64xf32>
    %10 = math.exp %9 : vector<1x64x64xf32>
    %cst = arith.constant 1.000000e+00 : f32
    %11 = vector.broadcast %cst : f32 to vector<1x64x64xf32>
    %12 = arith.addf %11, %10 : vector<1x64x64xf32>
    %13 = arith.divf %11, %12 : vector<1x64x64xf32>
    %14 = arith.mulf %8, %13 : vector<1x64x64xf32>
    %15 = vector.shape_cast %14 : vector<1x64x64xf32> to vector<64x64xf32>
    %cst_6 = arith.constant dense<0.000000e+00> : vector<64xf32>
    %16 = vector.multi_reduction <add>, %15, %cst_6 [0] : vector<64x64xf32> to vector<64xf32>
    %17 = vector.shape_cast %16 : vector<64xf32> to vector<1x64xf32>
    %18 = vector.shape_cast %17 : vector<1x64xf32> to vector<1x64x1xf32>
    %c0_7 = arith.constant 0 : index
    %c0_8 = arith.constant 0 : index
    %19 = vector.load %arg4[%c0_7, %c0_8] : memref<64x1xf32, #tpu.memory_space<vmem>>, vector<64x1xf32>
    %20 = vector.shape_cast %19 : vector<64x1xf32> to vector<1x64x1xf32>
    %21 = arith.mulf %18, %20 : vector<1x64x1xf32>
    %cst_9 = arith.constant dense<0.000000e+00> : vector<1x1xf32>
    %22 = vector.multi_reduction <add>, %21, %cst_9 [1] : vector<1x64x1xf32> to vector<1x1xf32>
    %cst_10 = arith.constant 0.000000e+00 : f32
    %23 = vector.broadcast %cst_10 : f32 to vector<1x1xf32>
    %24 = arith.maximumf %22, %23 : vector<1x1xf32>
    %25 = vector.shape_cast %24 : vector<1x1xf32> to vector<1x1x1xf32>
    %c0_11 = arith.constant 0 : index
    %c0_12 = arith.constant 0 : index
    %26 = vector.load %arg5[%c0_11, %c0_12] : memref<1x64xf32, #tpu.memory_space<vmem>>, vector<1x64xf32>
    %27 = vector.shape_cast %26 : vector<1x64xf32> to vector<1x1x64xf32>
    %28 = vector.broadcast %25 : vector<1x1x1xf32> to vector<1x1x64xf32>
    %29 = arith.mulf %28, %27 : vector<1x1x64xf32>
    %cst_13 = arith.constant dense<0.000000e+00> : vector<1x64xf32>
    %30 = vector.multi_reduction <add>, %29, %cst_13 [1] : vector<1x1x64xf32> to vector<1x64xf32>
    %31 = arith.negf %30 : vector<1x64xf32>
    %32 = math.exp %31 : vector<1x64xf32>
    %cst_14 = arith.constant 1.000000e+00 : f32
    %33 = vector.broadcast %cst_14 : f32 to vector<1x64xf32>
    %34 = arith.addf %33, %32 : vector<1x64xf32>
    %35 = arith.divf %33, %34 : vector<1x64xf32>
    %36 = vector.shape_cast %35 : vector<1x64xf32> to vector<1x1x64xf32>
    %37 = vector.broadcast %36 : vector<1x1x64xf32> to vector<1x64x64xf32>
    %38 = arith.mulf %14, %37 : vector<1x64x64xf32>
    %c0_15 = arith.constant 0 : index
    %c0_16 = arith.constant 0 : index
    %c0_17 = arith.constant 0 : index
    %39 = vector.load %arg6[%c0_15, %c0_16, %c0_17] : memref<1x64x64xf32, #tpu.memory_space<vmem>>, vector<1x64x64xf32>
    tpu.vector_store %arg6[%c0_15, %c0_16, %c0_17], %38 {strides = array<i32>} : memref<1x64x64xf32, #tpu.memory_space<vmem>>, vector<1x64x64xf32>,
    return
  }
  func.func @transform_0(%arg0: i32) -> (i32, i32, i32) {
    %c0_i32 = arith.constant 0 : i32
    %c0_i32_0 = arith.constant 0 : i32
    %c0_i32_1 = arith.constant 0 : i32
    return %arg0, %c0_i32, %c0_i32_0 : i32, i32, i32
  }
  func.func @transform_1(%arg0: i32) -> (i32, i32) {
    %c0_i32 = arith.constant 0 : i32
    %c0_i32_0 = arith.constant 0 : i32
    %c0_i32_1 = arith.constant 0 : i32
    return %c0_i32, %c0_i32_0 : i32, i32
  }
  func.func @transform_2(%arg0: i32) -> (i32, i32) {
    %c0_i32 = arith.constant 0 : i32
    %c0_i32_0 = arith.constant 0 : i32
    %c0_i32_1 = arith.constant 0 : i32
    return %c0_i32, %c0_i32_0 : i32, i32
  }
  func.func @transform_3(%arg0: i32) -> (i32, i32) {
    %c0_i32 = arith.constant 0 : i32
    %c0_i32_0 = arith.constant 0 : i32
    %c0_i32_1 = arith.constant 0 : i32
    return %c0_i32, %c0_i32_0 : i32, i32
  }
  func.func @transform_4(%arg0: i32) -> (i32, i32) {
    %c0_i32 = arith.constant 0 : i32
    %c0_i32_0 = arith.constant 0 : i32
    %c0_i32_1 = arith.constant 0 : i32
    return %c0_i32, %c0_i32_0 : i32, i32
  }
  func.func @transform_5(%arg0: i32) -> (i32, i32, i32) {
    %c0_i32 = arith.constant 0 : i32
    %c0_i32_0 = arith.constant 0 : i32
    %c0_i32_1 = arith.constant 0 : i32
    return %arg0, %c0_i32, %c0_i32_0 : i32, i32, i32
  }
}

</mosaic_0001>

<llo_original>
// kernel: tile.29
$region0: #{tile.29}
  %s0 = inlined_call_operand.vmem [shape: f32[4,16], index: 0, kind: input, shape index: {}]
  %s1 = inlined_call_operand.vmem [shape: f32[1,64], index: 1, kind: output, shape index: {}]
  $region1: #{tile.29} parent=0
    #allocation0 [shape = 'u8[4096]{0}', space=vmem, size = 0x1000, scoped, tag = 'scoped mem for output reshape']
    #allocation1 [shape = 'u8[4096]{0}', space=vmem, size = 0x1000, scoped, tag = 'scoped mem for input reshape']
    %s3 = sshll.u32 1, 4
    %s4 = ssub.s32 %s3, 1
    %v5 = vld [vmem:[%s0] sm:%s4]
    %6 = vst [vmem:[#allocation1] sm:%s4] %v5
    %v7 = vld [vmem:[#allocation1] sm:$0x1]
    %vm8 = vcmask 130048
    %9 = vst.msk [vmem:[#allocation0] sm:$0x1] %vm8, %v7
    %s10 = scalar_lea.vmem [#allocation1], 3
    %v11 = vld [vmem:[%s10] sm:$0x1]
    %12 = vrot.lane.b32.xlu0 %v11, 48
    %v13 = vpop.permute.xlu0 %12
    %vm14 = vcmask 523648
    %15 = vst.msk [vmem:[#allocation0] sm:$0x1] %vm14, %v13
    %s16 = scalar_lea.vmem [#allocation1], 2
    %v17 = vld [vmem:[%s16] sm:$0x1]
    %18 = vrot.lane.b32.xlu0 %v17, 32
    %v19 = vpop.permute.xlu0 %18
    %vm20 = vcmask 392448
    %21 = vst.msk [vmem:[#allocation0] sm:$0x1] %vm20, %v19
    %s22 = scalar_lea.vmem [#allocation1], 1
    %v23 = vld [vmem:[%s22] sm:$0x1]
    %24 = vrot.lane.b32.xlu0 %v23, 16
    %v25 = vpop.permute.xlu0 %24
    %vm26 = vcmask 261248
    %27 = vst.msk [vmem:[#allocation0] sm:$0x1] %vm26, %v25
    %s29 = sshll.u32 1, 1
    %s30 = ssub.s32 %s29, 1
    %v32 = vld [vmem:[#allocation0] sm:%s30]
    %s33 = sshll.u32 1, 1
    %s34 = ssub.s32 %s33, 1
    %35 = vst [vmem:[%s1] sm:%s34] %v32

// kernel: decoder_block.3
$region0: #{decoder_block.3}
  #allocation0 [shape = 'u32[]', space=smem, size = 0x4, offset = 0x4, fixed_abs, tag = 'smem constant byte address 0x4 - core index']
  #allocation1 [shape = 'u32[144,128]{1,0:T(1,128)}', space=vmem, size = 0x12000, scoped, tag = 'internal scratch']
  %s0 = inlined_call_operand.vmem [shape: f32[2,64,64], index: 0, kind: input, shape index: {}]
  %s1 = inlined_call_operand.vmem [shape: f32[1,64], index: 1, kind: input, shape index: {}]
  %s2 = inlined_call_operand.vmem [shape: f32[1,64], index: 2, kind: input, shape index: {}]
  %s3 = inlined_call_operand.vmem [shape: f32[64,1], index: 3, kind: input, shape index: {}]
  %s4 = inlined_call_operand.vmem [shape: f32[1,64], index: 4, kind: input, shape index: {}]
  %s5 = inlined_call_operand.vmem [shape: f32[2,64,64], index: 5, kind: output, shape index: {}]
  %s6 = sld [smem:[#allocation0]]
  $region53: #{decoder_block.3} parent=0
    _
  %s8 = ssub.s32 1, %s6
  %s9 = scalar_select 0, %s8, %s6
  loop: start=0, step=1, limit=4
  $region2: #{decoder_block.3} parent=0 // loop_pre_header
    _
  $region3: #{decoder_block.3} parent=0 // loop_header
    %s11 = sphi 0, %s15
    %p12 = scmp.ge.s32.totalorder %s11, 4
    %s21 = sphi 0, %s23
    %s24 = sphi 0, %s21
    %s25 = sphi 0, %s24
    %s41 = sphi 0, %s25
    %s45 = sphi 0, %s45
    %s47 = sphi 0, %s45
    %s48 = sphi 0, %s47
    %s62 = sphi 0, %s48
    %s66 = sphi 0, %s66
    %s68 = sphi 0, %s66
    %s69 = sphi 0, %s68
    %s83 = sphi 0, %s69
    %s87 = sphi 0, %s87
    %s89 = sphi 0, %s87
    %s90 = sphi 0, %s89
    %s104 = sphi 0, %s90
    %s108 = sphi 0, %s108
    %s110 = sphi 0, %s108
    %s111 = sphi 0, %s110
    %s125 = sphi 0, %s111
    %s131 = sphi 0, %s133
    %s134 = sphi 0, %s131
    %s135 = sphi 0, %s134
    %s151 = sphi 0, %s135
  $region4: #{decoder_block.3} parent=0 // loop_header_branch
    %14 = sbr.rel (%p12) target = $region8
  $region5: #{decoder_block.3} parent=0 // loop_body
    %s16 = ssub.s32 %s11, 1
    %s17 = ssub.s32 %s11, 2
    %s18 = sadd.s32 %s11, 1
    %s19 = ssub.s32 %s11, %s18
    %p20 = scmp.eq.s32.totalorder %s19, 0
    %s22 = sadd.s32 %s21, 1
    %s23 = scalar_select %p20, %s21, %s22
    %p26 = pneg %p20
    %p27 = scmp.eq.s32.totalorder %s11, 1
    %p28 = por %p26, %p27
    %p29 = scmp.ne.s32.totalorder %s21, %s24
    %p30 = scmp.eq.s32.totalorder %s11, 0
    %p31 = por %p29, %p30
    %p32 = scmp.ne.s32.totalorder %s21, %s24
    %p33 = scmp.eq.s32.totalorder %s16, 1
    %p34 = por %p32, %p33
    %p35 = scmp.ne.s32.totalorder %s24, %s25
    %p36 = scmp.eq.s32.totalorder %s16, 0
    %p37 = por %p35, %p36
    %p38 = scmp.ne.s32.totalorder %s24, %s25
    %p39 = scmp.eq.s32.totalorder %s17, 1
    %p40 = por %p38, %p39
    %p42 = scmp.ne.s32.totalorder %s25, %s41
    %p43 = scmp.eq.s32.totalorder %s17, 0
    %p44 = por %p42, %p43
    %s46 = sadd.s32 %s45, 1
    %p49 = scmp.eq.s32.totalorder %s11, 1
    %p50 = scmp.ne.s32.totalorder %s45, %s47
    %p51 = scmp.eq.s32.totalorder %s11, 0
    %p52 = por %p50, %p51
    %p53 = scmp.ne.s32.totalorder %s45, %s47
    %p54 = scmp.eq.s32.totalorder %s16, 1
    %p55 = por %p53, %p54
    %p56 = scmp.ne.s32.totalorder %s47, %s48
    %p57 = scmp.eq.s32.totalorder %s16, 0
    %p58 = por %p56, %p57
    %p59 = scmp.ne.s32.totalorder %s47, %s48
    %p60 = scmp.eq.s32.totalorder %s17, 1
    %p61 = por %p59, %p60
    %p63 = scmp.ne.s32.totalorder %s48, %s62
    %p64 = scmp.eq.s32.totalorder %s17, 0
    %p65 = por %p63, %p64
    %s67 = sadd.s32 %s66, 1
    %p70 = scmp.eq.s32.totalorder %s11, 1
    %p71 = scmp.ne.s32.totalorder %s66, %s68
    %p72 = scmp.eq.s32.totalorder %s11, 0
    %p73 = por %p71, %p72
    %p74 = scmp.ne.s32.totalorder %s66, %s68
    %p75 = scmp.eq.s32.totalorder %s16, 1
    %p76 = por %p74, %p75
    %p77 = scmp.ne.s32.totalorder %s68, %s69
    %p78 = scmp.eq.s32.totalorder %s16, 0
    %p79 = por %p77, %p78
    %p80 = scmp.ne.s32.totalorder %s68, %s69
    %p81 = scmp.eq.s32.totalorder %s17, 1
    %p82 = por %p80, %p81
    %p84 = scmp.ne.s32.totalorder %s69, %s83
    %p85 = scmp.eq.s32.totalorder %s17, 0
    %p86 = por %p84, %p85
    %s88 = sadd.s32 %s87, 1
    %p91 = scmp.eq.s32.totalorder %s11, 1
    %p92 = scmp.ne.s32.totalorder %s87, %s89
    %p93 = scmp.eq.s32.totalorder %s11, 0
    %p94 = por %p92, %p93
    %p95 = scmp.ne.s32.totalorder %s87, %s89
    %p96 = scmp.eq.s32.totalorder %s16, 1
    %p97 = por %p95, %p96
    %p98 = scmp.ne.s32.totalorder %s89, %s90
    %p99 = scmp.eq.s32.totalorder %s16, 0
    %p100 = por %p98, %p99
    %p101 = scmp.ne.s32.totalorder %s89, %s90
    %p102 = scmp.eq.s32.totalorder %s17, 1
    %p103 = por %p101, %p102
    %p105 = scmp.ne.s32.totalorder %s90, %s104
    %p106 = scmp.eq.s32.totalorder %s17, 0
    %p107 = por %p105, %p106
    %s109 = sadd.s32 %s108, 1
    %p112 = scmp.eq.s32.totalorder %s11, 1
    %p113 = scmp.ne.s32.totalorder %s108, %s110
    %p114 = scmp.eq.s32.totalorder %s11, 0
    %p115 = por %p113, %p114
    %p116 = scmp.ne.s32.totalorder %s108, %s110
    %p117 = scmp.eq.s32.totalorder %s16, 1
    %p118 = por %p116, %p117
    %p119 = scmp.ne.s32.totalorder %s110, %s111
    %p120 = scmp.eq.s32.totalorder %s16, 0
    %p121 = por %p119, %p120
    %p122 = scmp.ne.s32.totalorder %s110, %s111
    %p123 = scmp.eq.s32.totalorder %s17, 1
    %p124 = por %p122, %p123
    %p126 = scmp.ne.s32.totalorder %s111, %s125
    %p127 = scmp.eq.s32.totalorder %s17, 0
    %p128 = por %p126, %p127
    %s129 = ssub.s32 %s11, %s18
    %p130 = scmp.eq.s32.totalorder %s129, 0
    %s132 = sadd.s32 %s131, 1
    %s133 = scalar_select %p130, %s131, %s132
    %p136 = pneg %p130
    %p137 = scmp.eq.s32.totalorder %s11, 1
    %p138 = por %p136, %p137
    %p139 = scmp.ne.s32.totalorder %s131, %s134
    %p140 = scmp.eq.s32.totalorder %s11, 0
    %p141 = por %p139, %p140
    %p142 = scmp.ne.s32.totalorder %s131, %s134
    %p143 = scmp.eq.s32.totalorder %s16, 1
    %p144 = por %p142, %p143
    %p145 = scmp.ne.s32.totalorder %s134, %s135
    %p146 = scmp.eq.s32.totalorder %s16, 0
    %p147 = por %p145, %p146
    %p148 = scmp.ne.s32.totalorder %s134, %s135
    %p149 = scmp.eq.s32.totalorder %s17, 1
    %p150 = por %p148, %p149
    %p152 = scmp.ne.s32.totalorder %s135, %s151
    %p153 = scmp.eq.s32.totalorder %s17, 0
    %p154 = por %p152, %p153
    %p155 = scmp.le.s32.totalorder 1, %s11
    %p156 = scmp.lt.s32.totalorder %s11, 3
    %p157 = pnand %p155, %p156
    %p158 = pneg %p157
    // Predicated region
    $region9: #{decoder_block.3} parent=5 // pred_check
      _
    $region10: #{decoder_block.3} parent=5 // pred_check_branch
      %160 = sbr.rel (%p157) target = $region12
    $region11: #{decoder_block.3} parent=5 // pred_region
      %s161 = ssub.s32 %s11, 1
      // Predicated region
      $region13: #{decoder_block.3} parent=11 // pred_check
        %p162 = pneg %p58
      $region14: #{decoder_block.3} parent=11 // pred_check_branch
        %164 = sbr.rel (%p162) target = $region16
      $region15: #{decoder_block.3} parent=11 // pred_region
        _
      $region16: #{decoder_block.3} parent=11 // pred_fallthru
        _
      // Predicated region
      $region17: #{decoder_block.3} parent=11 // pred_check
        %p165 = pneg %p79
      $region18: #{decoder_block.3} parent=11 // pred_check_branch
        %167 = sbr.rel (%p165) target = $region20
      $region19: #{decoder_block.3} parent=11 // pred_region
        _
      $region20: #{decoder_block.3} parent=11 // pred_fallthru
        _
      // Predicated region
      $region21: #{decoder_block.3} parent=11 // pred_check
        %p168 = pneg %p100
      $region22: #{decoder_block.3} parent=11 // pred_check_branch
        %170 = sbr.rel (%p168) target = $region24
      $region23: #{decoder_block.3} parent=11 // pred_region
        _
      $region24: #{decoder_block.3} parent=11 // pred_fallthru
        _
      // Predicated region
      $region25: #{decoder_block.3} parent=11 // pred_check
        %p171 = pneg %p121
      $region26: #{decoder_block.3} parent=11 // pred_check_branch
        %173 = sbr.rel (%p171) target = $region28
      $region27: #{decoder_block.3} parent=11 // pred_region
        _
      $region28: #{decoder_block.3} parent=11 // pred_fallthru
        _
    $region12: #{decoder_block.3} parent=5 // pred_fallthru
      _
    %p174 = scmp.lt.s32.totalorder %s11, 2
    // Predicated region
    $region29: #{decoder_block.3} parent=5 // pred_check
      %p175 = pneg %p174
    $region30: #{decoder_block.3} parent=5 // pred_check_branch
      %177 = sbr.rel (%p175) target = $region32
    $region31: #{decoder_block.3} parent=5 // pred_region
      // Predicated region
      $region33: #{decoder_block.3} parent=31 // pred_check
        %p178 = pneg %p31
      $region34: #{decoder_block.3} parent=31 // pred_check_branch
        %180 = sbr.rel (%p178) target = $region36
      $region35: #{decoder_block.3} parent=31 // pred_region
        %p181 = scmp.lt.s32.totalorder %s11, 1
        %s182 = scalar_select %p181, %s11, 1
        %s183 = smul.addr %s182, 8
        %s184 = smul.addr %s183, 8
        %s185 = scalar_lea.vmem %s0, %s184
      $region36: #{decoder_block.3} parent=31 // pred_fallthru
        _
    $region32: #{decoder_block.3} parent=5 // pred_fallthru
      _
    %p186 = scmp.le.s32.totalorder 1, %s11
    %p187 = scmp.lt.s32.totalorder %s11, 3
    %p188 = pnand %p186, %p187
    %p189 = pneg %p188
    // Predicated region
    $region37: #{decoder_block.3} parent=5 // pred_check
      _
    $region38: #{decoder_block.3} parent=5 // pred_check_branch
      %191 = sbr.rel (%p188) target = $region40
    $region39: #{decoder_block.3} parent=5 // pred_region
      %s192 = ssub.s32 %s11, 1
      %p193 = scmp.lt.s32.totalorder %s16, 1
      %s194 = scalar_select %p193, %s16, 1
      %s195 = smul.addr %s194, 8
      %s196 = smul.addr %s195, 8
      %s197 = scalar_lea.vmem %s0, %s196
      %p198 = pneg %p37
      %p199 = pneg %p34
      %p200 = pneg %p58
      %p201 = pneg %p55
      %p202 = pneg %p79
      %p203 = pneg %p76
      %p204 = pneg %p100
      %p205 = pneg %p97
      %p206 = pneg %p121
      %p207 = pneg %p118
      %p208 = pneg %p147
      %p209 = pneg %p144
      %p210 = scmp.lt.s32.totalorder %s16, 1
      %s211 = scalar_select %p210, %s16, 1
      %s212 = smul.addr %s211, 8
      %s213 = smul.addr %s212, 8
      %s214 = scalar_lea.vmem %s5, %s213
      %p215 = scmp.lt.s32.totalorder %s16, 1
      %s216 = scalar_select %p215, %s16, 1
      %s217 = smul.addr %s216, 8
      %s218 = smul.addr %s217, 8
      %s219 = scalar_lea.vmem %s0, %s218
      %p220 = scmp.lt.s32.totalorder %s16, 1
      %s221 = scalar_select %p220, %s16, 1
      %s222 = smul.addr %s221, 8
      %s223 = smul.addr %s222, 8
      %s224 = scalar_lea.vmem %s5, %s223
      %v225 = vld [vmem:[%s219] sm:$0xff]
      %v226 = vld [vmem:[%s219 + $0x8] sm:$0xff]
      %v227 = vld [vmem:[%s219 + $0x10] sm:$0xff]
      %v228 = vld [vmem:[%s219 + $0x18] sm:$0xff]
      %v229 = vld [vmem:[%s219 + $0x20] sm:$0xff]
      %v230 = vld [vmem:[%s219 + $0x28] sm:$0xff]
      %v231 = vld [vmem:[%s219 + $0x30] sm:$0xff]
      %v232 = vld [vmem:[%s219 + $0x38] sm:$0xff]
      %v233 = vld [vmem:[%s1] sm:$0x1]
      %v235 = vlaneseq
      %v236 = vshrl.u32 %v235, 7
      %v237 = vsub.s32 0, %v236
      %v238 = vrot.slane %v233, %v237
      %v240 = vmul.f32 %v225, %v238
      %v241 = vmul.f32 %v226, %v238
      %v242 = vmul.f32 %v227, %v238
      %v243 = vmul.f32 %v228, %v238
      %v244 = vmul.f32 %v229, %v238
      %v245 = vmul.f32 %v230, %v238
      %v246 = vmul.f32 %v231, %v238
      %v247 = vmul.f32 %v232, %v238
      %v248 = vld [vmem:[%s2] sm:$0x1]
      %v250 = vlaneseq
      %v251 = vshrl.u32 %v250, 7
      %v252 = vsub.s32 0, %v251
      %v253 = vrot.slane %v248, %v252
      %v255 = vadd.f32 %v240, %v253
      %v256 = vadd.f32 %v241, %v253
      %v257 = vadd.f32 %v242, %v253
      %v258 = vadd.f32 %v243, %v253
      %v259 = vadd.f32 %v244, %v253
      %v260 = vadd.f32 %v245, %v253
      %v261 = vadd.f32 %v246, %v253
      %v262 = vadd.f32 %v247, %v253
      %v263 = vxor.u32 %v255, 2147483648
      %v264 = vxor.u32 %v256, 2147483648
      %v265 = vxor.u32 %v257, 2147483648
      %v266 = vxor.u32 %v258, 2147483648
      %v267 = vxor.u32 %v259, 2147483648
      %v268 = vxor.u32 %v260, 2147483648
      %v269 = vxor.u32 %v261, 2147483648
      %v270 = vxor.u32 %v262, 2147483648
      %v271 = vmul.f32 %v263, 1.442695
      %v272 = vpow.pop %v271
      %v273 = vmul.f32 %v264, 1.442695
      %v274 = vpow.pop %v273
      %v275 = vmul.f32 %v265, 1.442695
      %v276 = vpow.pop %v275
      %v277 = vmul.f32 %v266, 1.442695
      %v278 = vpow.pop %v277
      %v279 = vmul.f32 %v267, 1.442695
      %v280 = vpow.pop %v279
      %v281 = vmul.f32 %v268, 1.442695
      %v282 = vpow.pop %v281
      %v283 = vmul.f32 %v269, 1.442695
      %v284 = vpow.pop %v283
      %v285 = vmul.f32 %v270, 1.442695
      %v286 = vpow.pop %v285
      %v287 = vadd.f32 %v272, 1.0
      %v288 = vadd.f32 %v274, 1.0
      %v289 = vadd.f32 %v276, 1.0
      %v290 = vadd.f32 %v278, 1.0
      %v291 = vadd.f32 %v280, 1.0
      %v292 = vadd.f32 %v282, 1.0
      %v293 = vadd.f32 %v284, 1.0
      %v294 = vadd.f32 %v286, 1.0
      %v295 = vrcp.pop %v287
      %v296 = vmul.f32 1.0, %v295
      %v297 = vrcp.pop %v288
      %v298 = vmul.f32 1.0, %v297
      %v299 = vrcp.pop %v289
      %v300 = vmul.f32 1.0, %v299
      %v301 = vrcp.pop %v290
      %v302 = vmul.f32 1.0, %v301
      %v303 = vrcp.pop %v291
      %v304 = vmul.f32 1.0, %v303
      %v305 = vrcp.pop %v292
      %v306 = vmul.f32 1.0, %v305
      %v307 = vrcp.pop %v293
      %v308 = vmul.f32 1.0, %v307
      %v309 = vrcp.pop %v294
      %v310 = vmul.f32 1.0, %v309
      %v311 = vmul.f32 %v255, %v296
      %v312 = vmul.f32 %v256, %v298
      %v313 = vmul.f32 %v257, %v300
      %v314 = vmul.f32 %v258, %v302
      %v315 = vmul.f32 %v259, %v304
      %v316 = vmul.f32 %v260, %v306
      %v317 = vmul.f32 %v261, %v308
      %v318 = vmul.f32 %v262, %v310
      %vm319 = vcmask 523264
      %v320 = vsel %vm319, %v311, 0.0
      %v321 = vsel %vm319, %v312, 0.0
      %v322 = vadd.f32 %v320, %v321
      %v323 = vsel %vm319, %v313, 0.0
      %v324 = vadd.f32 %v322, %v323
      %v325 = vsel %vm319, %v314, 0.0
      %v326 = vadd.f32 %v324, %v325
      %v327 = vsel %vm319, %v315, 0.0
      %v328 = vadd.f32 %v326, %v327
      %v329 = vsel %vm319, %v316, 0.0
      %v330 = vadd.f32 %v328, %v329
      %v331 = vsel %vm319, %v317, 0.0
      %v332 = vadd.f32 %v330, %v331
      %v333 = vsel %vm319, %v318, 0.0
      %v334 = vadd.f32 %v332, %v333
      %v335 = vrot.slane %v334, 4
      %v336 = vadd.f32 %v334, %v335
      %v337 = vrot.slane %v336, 2
      %v338 = vadd.f32 %v336, %v337
      %v339 = vrot.slane %v338, 1
      %v340 = vadd.f32 %v338, %v339
      %342 = vbcast.lane.b32.xlu0 %v340, 256
      %v343 = vpop.permute.xlu0 %342
      %s345 = sor.u32 256, 8
      %346 = vbcast.lane.b32.xlu0 %v340, %s345
      %v347 = vpop.permute.xlu0 %346
      %s349 = sor.u32 256, 16
      %350 = vbcast.lane.b32.xlu0 %v340, %s349
      %v351 = vpop.permute.xlu0 %350
      %s353 = sor.u32 256, 24
      %354 = vbcast.lane.b32.xlu0 %v340, %s353
      %v355 = vpop.permute.xlu0 %354
      %s357 = sor.u32 256, 32
      %358 = vbcast.lane.b32.xlu0 %v340, %s357
      %v359 = vpop.permute.xlu0 %358
      %s361 = sor.u32 256, 40
      %362 = vbcast.lane.b32.xlu0 %v340, %s361
      %v363 = vpop.permute.xlu0 %362
      %s365 = sor.u32 256, 48
      %366 = vbcast.lane.b32.xlu0 %v340, %s365
      %v367 = vpop.permute.xlu0 %366
      %s369 = sor.u32 256, 56
      %370 = vbcast.lane.b32.xlu0 %v340, %s369
      %v371 = vpop.permute.xlu0 %370
      %v372 = vld [vmem:[%s3] sm:$0xff]
      %v373 = vld [vmem:[%s3 + $0x8] sm:$0xff]
      %v374 = vld [vmem:[%s3 + $0x10] sm:$0xff]
      %v375 = vld [vmem:[%s3 + $0x18] sm:$0xff]
      %v376 = vld [vmem:[%s3 + $0x20] sm:$0xff]
      %v377 = vld [vmem:[%s3 + $0x28] sm:$0xff]
      %v378 = vld [vmem:[%s3 + $0x30] sm:$0xff]
      %v379 = vld [vmem:[%s3 + $0x38] sm:$0xff]
      %v380 = vmul.f32 %v343, %v372
      %v381 = vmul.f32 %v347, %v373
      %v382 = vmul.f32 %v351, %v374
      %v383 = vmul.f32 %v355, %v375
      %v384 = vmul.f32 %v359, %v376
      %v385 = vmul.f32 %v363, %v377
      %v386 = vmul.f32 %v367, %v378
      %v387 = vmul.f32 %v371, %v379
      %vm388 = vcmask 7168
      %v389 = vsel %vm388, %v380, 0.0
      %v390 = vsel %vm388, %v381, 0.0
      %v391 = vadd.f32 %v389, %v390
      %v392 = vsel %vm388, %v382, 0.0
      %v393 = vadd.f32 %v391, %v392
      %v394 = vsel %vm388, %v383, 0.0
      %v395 = vadd.f32 %v393, %v394
      %v396 = vsel %vm388, %v384, 0.0
      %v397 = vadd.f32 %v395, %v396
      %v398 = vsel %vm388, %v385, 0.0
      %v399 = vadd.f32 %v397, %v398
      %v400 = vsel %vm388, %v386, 0.0
      %v401 = vadd.f32 %v399, %v400
      %v402 = vsel %vm388, %v387, 0.0
      %v403 = vadd.f32 %v401, %v402
      %v404 = vrot.slane %v403, 4
      %v405 = vadd.f32 %v403, %v404
      %v406 = vrot.slane %v405, 2
      %v407 = vadd.f32 %v405, %v406
      %v408 = vrot.slane %v407, 1
      %v409 = vadd.f32 %v407, %v408
      %v410 = vmax.f32 %v409, 0.0
      %v411 = vld [vmem:[%s4] sm:$0x1]
      %413 = vset.pattern.permute.xlu0 0
      %414 = vperm.xlu0 %413, %v410
      %v415 = vpop.permute.xlu0 %414
      %v417 = vmul.f32 %v415, %v411
      %v418 = vadd.f32 %v417, 0.0
      %v419 = vxor.u32 %v418, 2147483648
      %v420 = vmul.f32 %v419, 1.442695
      %v421 = vpow.pop %v420
      %v422 = vadd.f32 %v421, 1.0
      %v423 = vrcp.pop %v422
      %v424 = vmul.f32 1.0, %v423
      %v426 = vlaneseq
      %v427 = vshrl.u32 %v426, 7
      %v428 = vsub.s32 0, %v427
      %v429 = vrot.slane %v424, %v428
      %v431 = vmul.f32 %v311, %v429
      %v432 = vmul.f32 %v312, %v429
      %v433 = vmul.f32 %v313, %v429
      %v434 = vmul.f32 %v314, %v429
      %v435 = vmul.f32 %v315, %v429
      %v436 = vmul.f32 %v316, %v429
      %v437 = vmul.f32 %v317, %v429
      %v438 = vmul.f32 %v318, %v429
      %439 = vst.msk [vmem:[%s224] sm:$0xff] %vm319, %v431
      %440 = vst.msk [vmem:[%s224 + $0x8] sm:$0xff] %vm319, %v432
      %441 = vst.msk [vmem:[%s224 + $0x10] sm:$0xff] %vm319, %v433
      %442 = vst.msk [vmem:[%s224 + $0x18] sm:$0xff] %vm319, %v434
      %443 = vst.msk [vmem:[%s224 + $0x20] sm:$0xff] %vm319, %v435
      %444 = vst.msk [vmem:[%s224 + $0x28] sm:$0xff] %vm319, %v436
      %445 = vst.msk [vmem:[%s224 + $0x30] sm:$0xff] %vm319, %v437
      %446 = vst.msk [vmem:[%s224 + $0x38] sm:$0xff] %vm319, %v438
      %p447 = scmp.lt.s32.totalorder %s16, 1
      %s448 = scalar_select %p447, %s16, 1
      %s449 = smul.addr %s448, 8
      %s450 = smul.addr %s449, 8
      %s451 = scalar_lea.vmem %s5, %s450
      // Predicated region
      $region41: #{decoder_block.3} parent=39 // pred_check
        %p452 = pneg %p144
      $region42: #{decoder_block.3} parent=39 // pred_check_branch
        %454 = sbr.rel (%p452) target = $region44
      $region43: #{decoder_block.3} parent=39 // pred_region
        _
      $region44: #{decoder_block.3} parent=39 // pred_fallthru
        _
    $region40: #{decoder_block.3} parent=5 // pred_fallthru
      _
    %p455 = scmp.le.s32.totalorder 2, %s11
    // Predicated region
    $region45: #{decoder_block.3} parent=5 // pred_check
      %p456 = pneg %p455
    $region46: #{decoder_block.3} parent=5 // pred_check_branch
      %458 = sbr.rel (%p456) target = $region48
    $region47: #{decoder_block.3} parent=5 // pred_region
      %s459 = ssub.s32 %s11, 2
      // Predicated region
      $region49: #{decoder_block.3} parent=47 // pred_check
        %p460 = pneg %p150
      $region50: #{decoder_block.3} parent=47 // pred_check_branch
        %462 = sbr.rel (%p460) target = $region52
      $region51: #{decoder_block.3} parent=47 // pred_region
        %p463 = scmp.lt.s32.totalorder %s17, 1
        %s464 = scalar_select %p463, %s17, 1
        %s465 = smul.addr %s464, 8
        %s466 = smul.addr %s465, 8
        %s467 = scalar_lea.vmem %s5, %s466
      $region52: #{decoder_block.3} parent=47 // pred_fallthru
        _
    $region48: #{decoder_block.3} parent=5 // pred_fallthru
      _
  $region6: #{decoder_block.3} parent=0 // loop_footer
    %s15 = sadd.s32 1, %s11
  $region7: #{decoder_block.3} parent=0 // loop_footer_branch
    %10 = sbr.rel target = $region3
  $region8: #{decoder_block.3} parent=0 // loop_exit
    _

// kernel: decoder_block.2
$region0: #{decoder_block.2}
  #allocation0 [shape = 'u32[]', space=smem, size = 0x4, offset = 0x4, fixed_abs, tag = 'smem constant byte address 0x4 - core index']
  #allocation1 [shape = 'u32[144,128]{1,0:T(1,128)}', space=vmem, size = 0x12000, scoped, tag = 'internal scratch']
  #allocation2 [shape = 'bf16[64,72]{1,0:T(8,128)(2,1)}', space=vmem, size = 0x4000, scoped, tag = 'scratch operand']
  %s0 = inlined_call_operand.vmem [shape: bf16[2,10,10,8], index: 0, kind: input, shape index: {}]
  %s1 = inlined_call_operand.vmem [shape: bf16[72,64], index: 1, kind: input, shape index: {}]
  %s2 = inlined_call_operand.vmem [shape: f32[1,64], index: 2, kind: input, shape index: {}]
  %s3 = inlined_call_operand.vmem [shape: f32[2,64,64], index: 3, kind: output, shape index: {0}]
  %s4 = inlined_call_operand.vmem [shape: f32[1,64], index: 4, kind: output, shape index: {1}]
  %s5 = inlined_call_operand.vmem [shape: f32[1,64], index: 5, kind: output, shape index: {2}]
  %6 = xla_tuple %s3, %s4, %s5
  %s7 = sld [smem:[#allocation0]]
  $region65: #{decoder_block.2} parent=0
    _
  %s9 = ssub.s32 1, %s7
  %s10 = scalar_select 0, %s9, %s7
  loop: start=0, step=1, limit=4
  $region2: #{decoder_block.2} parent=0 // loop_pre_header
    _
  $region3: #{decoder_block.2} parent=0 // loop_header
    %s12 = sphi 0, %s16
    %p13 = scmp.ge.s32.totalorder %s12, 4
    %s22 = sphi 0, %s24
    %s25 = sphi 0, %s22
    %s26 = sphi 0, %s25
    %s42 = sphi 0, %s26
    %s46 = sphi 0, %s46
    %s48 = sphi 0, %s46
    %s49 = sphi 0, %s48
    %s63 = sphi 0, %s49
    %s67 = sphi 0, %s67
    %s69 = sphi 0, %s67
    %s70 = sphi 0, %s69
    %s84 = sphi 0, %s70
    %s90 = sphi 0, %s92
    %s93 = sphi 0, %s90
    %s94 = sphi 0, %s93
    %s110 = sphi 0, %s94
    %s114 = sphi 0, %s114
    %s116 = sphi 0, %s114
    %s117 = sphi 0, %s116
    %s131 = sphi 0, %s117
    %s135 = sphi 0, %s135
    %s137 = sphi 0, %s135
    %s138 = sphi 0, %s137
    %s152 = sphi 0, %s138
  $region4: #{decoder_block.2} parent=0 // loop_header_branch
    %15 = sbr.rel (%p13) target = $region8
  $region5: #{decoder_block.2} parent=0 // loop_body
    %s17 = ssub.s32 %s12, 1
    %s18 = ssub.s32 %s12, 2
    %s19 = sadd.s32 %s12, 1
    %s20 = ssub.s32 %s12, %s19
    %p21 = scmp.eq.s32.totalorder %s20, 0
    %s23 = sadd.s32 %s22, 1
    %s24 = scalar_select %p21, %s22, %s23
    %p27 = pneg %p21
    %p28 = scmp.eq.s32.totalorder %s12, 1
    %p29 = por %p27, %p28
    %p30 = scmp.ne.s32.totalorder %s22, %s25
    %p31 = scmp.eq.s32.totalorder %s12, 0
    %p32 = por %p30, %p31
    %p33 = scmp.ne.s32.totalorder %s22, %s25
    %p34 = scmp.eq.s32.totalorder %s17, 1
    %p35 = por %p33, %p34
    %p36 = scmp.ne.s32.totalorder %s25, %s26
    %p37 = scmp.eq.s32.totalorder %s17, 0
    %p38 = por %p36, %p37
    %p39 = scmp.ne.s32.totalorder %s25, %s26
    %p40 = scmp.eq.s32.totalorder %s18, 1
    %p41 = por %p39, %p40
    %p43 = scmp.ne.s32.totalorder %s26, %s42
    %p44 = scmp.eq.s32.totalorder %s18, 0
    %p45 = por %p43, %p44
    %s47 = sadd.s32 %s46, 1
    %p50 = scmp.eq.s32.totalorder %s12, 1
    %p51 = scmp.ne.s32.totalorder %s46, %s48
    %p52 = scmp.eq.s32.totalorder %s12, 0
    %p53 = por %p51, %p52
    %p54 = scmp.ne.s32.totalorder %s46, %s48
    %p55 = scmp.eq.s32.totalorder %s17, 1
    %p56 = por %p54, %p55
    %p57 = scmp.ne.s32.totalorder %s48, %s49
    %p58 = scmp.eq.s32.totalorder %s17, 0
    %p59 = por %p57, %p58
    %p60 = scmp.ne.s32.totalorder %s48, %s49
    %p61 = scmp.eq.s32.totalorder %s18, 1
    %p62 = por %p60, %p61
    %p64 = scmp.ne.s32.totalorder %s49, %s63
    %p65 = scmp.eq.s32.totalorder %s18, 0
    %p66 = por %p64, %p65
    %s68 = sadd.s32 %s67, 1
    %p71 = scmp.eq.s32.totalorder %s12, 1
    %p72 = scmp.ne.s32.totalorder %s67, %s69
    %p73 = scmp.eq.s32.totalorder %s12, 0
    %p74 = por %p72, %p73
    %p75 = scmp.ne.s32.totalorder %s67, %s69
    %p76 = scmp.eq.s32.totalorder %s17, 1
    %p77 = por %p75, %p76
    %p78 = scmp.ne.s32.totalorder %s69, %s70
    %p79 = scmp.eq.s32.totalorder %s17, 0
    %p80 = por %p78, %p79
    %p81 = scmp.ne.s32.totalorder %s69, %s70
    %p82 = scmp.eq.s32.totalorder %s18, 1
    %p83 = por %p81, %p82
    %p85 = scmp.ne.s32.totalorder %s70, %s84
    %p86 = scmp.eq.s32.totalorder %s18, 0
    %p87 = por %p85, %p86
    %s88 = ssub.s32 %s12, %s19
    %p89 = scmp.eq.s32.totalorder %s88, 0
    %s91 = sadd.s32 %s90, 1
    %s92 = scalar_select %p89, %s90, %s91
    %p95 = pneg %p89
    %p96 = scmp.eq.s32.totalorder %s12, 1
    %p97 = por %p95, %p96
    %p98 = scmp.ne.s32.totalorder %s90, %s93
    %p99 = scmp.eq.s32.totalorder %s12, 0
    %p100 = por %p98, %p99
    %p101 = scmp.ne.s32.totalorder %s90, %s93
    %p102 = scmp.eq.s32.totalorder %s17, 1
    %p103 = por %p101, %p102
    %p104 = scmp.ne.s32.totalorder %s93, %s94
    %p105 = scmp.eq.s32.totalorder %s17, 0
    %p106 = por %p104, %p105
    %p107 = scmp.ne.s32.totalorder %s93, %s94
    %p108 = scmp.eq.s32.totalorder %s18, 1
    %p109 = por %p107, %p108
    %p111 = scmp.ne.s32.totalorder %s94, %s110
    %p112 = scmp.eq.s32.totalorder %s18, 0
    %p113 = por %p111, %p112
    %s115 = sadd.s32 %s114, 1
    %p118 = scmp.eq.s32.totalorder %s12, 1
    %p119 = scmp.ne.s32.totalorder %s114, %s116
    %p120 = scmp.eq.s32.totalorder %s12, 0
    %p121 = por %p119, %p120
    %p122 = scmp.ne.s32.totalorder %s114, %s116
    %p123 = scmp.eq.s32.totalorder %s17, 1
    %p124 = por %p122, %p123
    %p125 = scmp.ne.s32.totalorder %s116, %s117
    %p126 = scmp.eq.s32.totalorder %s17, 0
    %p127 = por %p125, %p126
    %p128 = scmp.ne.s32.totalorder %s116, %s117
    %p129 = scmp.eq.s32.totalorder %s18, 1
    %p130 = por %p128, %p129
    %p132 = scmp.ne.s32.totalorder %s117, %s131
    %p133 = scmp.eq.s32.totalorder %s18, 0
    %p134 = por %p132, %p133
    %s136 = sadd.s32 %s135, 1
    %p139 = scmp.eq.s32.totalorder %s12, 1
    %p140 = scmp.ne.s32.totalorder %s135, %s137
    %p141 = scmp.eq.s32.totalorder %s12, 0
    %p142 = por %p140, %p141
    %p143 = scmp.ne.s32.totalorder %s135, %s137
    %p144 = scmp.eq.s32.totalorder %s17, 1
    %p145 = por %p143, %p144
    %p146 = scmp.ne.s32.totalorder %s137, %s138
    %p147 = scmp.eq.s32.totalorder %s17, 0
    %p148 = por %p146, %p147
    %p149 = scmp.ne.s32.totalorder %s137, %s138
    %p150 = scmp.eq.s32.totalorder %s18, 1
    %p151 = por %p149, %p150
    %p153 = scmp.ne.s32.totalorder %s138, %s152
    %p154 = scmp.eq.s32.totalorder %s18, 0
    %p155 = por %p153, %p154
    %p156 = scmp.le.s32.totalorder 1, %s12
    %p157 = scmp.lt.s32.totalorder %s12, 3
    %p158 = pnand %p156, %p157
    %p159 = pneg %p158
    // Predicated region
    $region9: #{decoder_block.2} parent=5 // pred_check
      _
    $region10: #{decoder_block.2} parent=5 // pred_check_branch
      %161 = sbr.rel (%p158) target = $region12
    $region11: #{decoder_block.2} parent=5 // pred_region
      %s162 = ssub.s32 %s12, 1
      // Predicated region
      $region13: #{decoder_block.2} parent=11 // pred_check
        %p163 = pneg %p59
      $region14: #{decoder_block.2} parent=11 // pred_check_branch
        %165 = sbr.rel (%p163) target = $region16
      $region15: #{decoder_block.2} parent=11 // pred_region
        _
      $region16: #{decoder_block.2} parent=11 // pred_fallthru
        _
      // Predicated region
      $region17: #{decoder_block.2} parent=11 // pred_check
        %p166 = pneg %p80
      $region18: #{decoder_block.2} parent=11 // pred_check_branch
        %168 = sbr.rel (%p166) target = $region20
      $region19: #{decoder_block.2} parent=11 // pred_region
        _
      $region20: #{decoder_block.2} parent=11 // pred_fallthru
        _
    $region12: #{decoder_block.2} parent=5 // pred_fallthru
      _
    %p169 = scmp.lt.s32.totalorder %s12, 2
    // Predicated region
    $region21: #{decoder_block.2} parent=5 // pred_check
      %p170 = pneg %p169
    $region22: #{decoder_block.2} parent=5 // pred_check_branch
      %172 = sbr.rel (%p170) target = $region24
    $region23: #{decoder_block.2} parent=5 // pred_region
      // Predicated region
      $region25: #{decoder_block.2} parent=23 // pred_check
        %p173 = pneg %p32
      $region26: #{decoder_block.2} parent=23 // pred_check_branch
        %175 = sbr.rel (%p173) target = $region28
      $region27: #{decoder_block.2} parent=23 // pred_region
        %p176 = scmp.lt.s32.totalorder %s12, 1
        %s177 = scalar_select %p176, %s12, 1
        %s178 = smul.addr %s177, 20
        %s179 = smul.addr %s178, 4
        %s180 = scalar_lea.vmem %s0, %s179
      $region28: #{decoder_block.2} parent=23 // pred_fallthru
        _
    $region24: #{decoder_block.2} parent=5 // pred_fallthru
      _
    %p181 = scmp.le.s32.totalorder 1, %s12
    %p182 = scmp.lt.s32.totalorder %s12, 3
    %p183 = pnand %p181, %p182
    %p184 = pneg %p183
    // Predicated region
    $region29: #{decoder_block.2} parent=5 // pred_check
      _
    $region30: #{decoder_block.2} parent=5 // pred_check_branch
      %186 = sbr.rel (%p183) target = $region32
    $region31: #{decoder_block.2} parent=5 // pred_region
      %s187 = ssub.s32 %s12, 1
      %p188 = scmp.lt.s32.totalorder %s17, 1
      %s189 = scalar_select %p188, %s17, 1
      %s190 = smul.addr %s189, 20
      %s191 = smul.addr %s190, 4
      %s192 = scalar_lea.vmem %s0, %s191
      %p193 = pneg %p38
      %p194 = pneg %p35
      %p195 = pneg %p59
      %p196 = pneg %p56
      %p197 = pneg %p80
      %p198 = pneg %p77
      %p199 = pneg %p106
      %p200 = pneg %p103
      %p201 = scmp.lt.s32.totalorder %s17, 1
      %s202 = scalar_select %p201, %s17, 1
      %s203 = smul.addr %s202, 8
      %s204 = smul.addr %s203, 8
      %s205 = scalar_lea.vmem %s3, %s204
      %p206 = pneg %p127
      %p207 = pneg %p124
      %p208 = pneg %p148
      %p209 = pneg %p145
      %p210 = scmp.lt.s32.totalorder %s17, 1
      %s211 = scalar_select %p210, %s17, 1
      %s212 = smul.addr %s211, 20
      %s213 = smul.addr %s212, 4
      %s214 = scalar_lea.vmem %s0, %s213
      %p215 = scmp.lt.s32.totalorder %s17, 1
      %s216 = scalar_select %p215, %s17, 1
      %s217 = smul.addr %s216, 8
      %s218 = smul.addr %s217, 8
      %s219 = scalar_lea.vmem %s3, %s218
      %p221 = scmp.eq.s32.totalorder %s17, 0
      // Predicated region
      $region33: #{decoder_block.2} parent=31 // pred_check
        %p222 = pneg %p221
      $region34: #{decoder_block.2} parent=31 // pred_check_branch
        %224 = sbr.rel (%p222) target = $region36
      $region35: #{decoder_block.2} parent=31 // pred_region
        %vm225 = vcmask 516096
        %226 = vst.msk [vmem:[%s4] sm:$0x1] %vm225, 0.0
        %227 = vst.msk [vmem:[%s5] sm:$0x1] %vm225, 0.0
      $region36: #{decoder_block.2} parent=31 // pred_fallthru
        _
      %v228 = vld [vmem:[%s214] sm:$0xf]
      %v229 = vld [vmem:[%s214 + $0x4] sm:$0x1]
      %v230 = vld [vmem:[%s214 + $0x8] sm:$0xf]
      %v231 = vld [vmem:[%s214 + $0xc] sm:$0x1]
      %v232 = vld [vmem:[%s214 + $0x10] sm:$0xf]
      %v233 = vld [vmem:[%s214 + $0x14] sm:$0x1]
      %v234 = vld [vmem:[%s214 + $0x18] sm:$0xf]
      %v235 = vld [vmem:[%s214 + $0x1c] sm:$0x1]
      %v236 = vld [vmem:[%s214 + $0x20] sm:$0xf]
      %v237 = vld [vmem:[%s214 + $0x24] sm:$0x1]
      %v238 = vld [vmem:[%s214 + $0x28] sm:$0xf]
      %v239 = vld [vmem:[%s214 + $0x2c] sm:$0x1]
      %v240 = vld [vmem:[%s214 + $0x30] sm:$0xf]
      %v241 = vld [vmem:[%s214 + $0x34] sm:$0x1]
      %v242 = vld [vmem:[%s214 + $0x38] sm:$0xf]
      %v243 = vld [vmem:[%s214 + $0x3c] sm:$0x1]
      %v244 = vld [vmem:[%s214 + $0x40] sm:$0xf]
      %v245 = vld [vmem:[%s214 + $0x44] sm:$0x1]
      %v246 = vld [vmem:[%s214 + $0x48] sm:$0xf]
      %v247 = vld [vmem:[%s214 + $0x4c] sm:$0x1]
      %vm248 = vcmask 60416
      %249 = vst.msk [vmem:[#allocation2] sm:$0xf] %vm248, %v228
      %250 = vst.msk [vmem:[#allocation2 + $0x4] sm:$0xf] %vm248, %v230
      %251 = vst.msk [vmem:[#allocation2 + $0x8] sm:$0xf] %vm248, %v232
      %252 = vst.msk [vmem:[#allocation2 + $0xc] sm:$0xf] %vm248, %v234
      %253 = vst.msk [vmem:[#allocation2 + $0x10] sm:$0xf] %vm248, %v236
      %254 = vst.msk [vmem:[#allocation2 + $0x14] sm:$0xf] %vm248, %v238
      %255 = vst.msk [vmem:[#allocation2 + $0x18] sm:$0xf] %vm248, %v240
      %256 = vst.msk [vmem:[#allocation2 + $0x1c] sm:$0xf] %vm248, %v242
      %vm257 = vsmask.f32 3328
      %vm258 = vsmask.f32 7440
      %vm259 = vmor %vm257, %vm258
      %v261 = vshrl.u32 %v228, 16
      %v263 = vrot.slane %v261, 4
      %v264 = vshll.u32 %v228, 16
      %v266 = vrot.slane %v264, 5
      %v267 = vor.u32 %v263, %v266
      %v268 = vrot.slane %v267, 4
      %v270 = vshll.u32 %v229, 16
      %v272 = vrot.slane %v270, 5
      %v273 = vsel %vm259, %v268, %v272
      %v275 = vshrl.u32 %v230, 16
      %v277 = vrot.slane %v275, 4
      %v278 = vshll.u32 %v230, 16
      %v280 = vrot.slane %v278, 5
      %v281 = vor.u32 %v277, %v280
      %v282 = vrot.slane %v281, 4
      %v284 = vshll.u32 %v231, 16
      %v286 = vrot.slane %v284, 5
      %v287 = vsel %vm259, %v282, %v286
      %v289 = vshrl.u32 %v232, 16
      %v291 = vrot.slane %v289, 4
      %v292 = vshll.u32 %v232, 16
      %v294 = vrot.slane %v292, 5
      %v295 = vor.u32 %v291, %v294
      %v296 = vrot.slane %v295, 4
      %v298 = vshll.u32 %v233, 16
      %v300 = vrot.slane %v298, 5
      %v301 = vsel %vm259, %v296, %v300
      %v303 = vshrl.u32 %v234, 16
      %v305 = vrot.slane %v303, 4
      %v306 = vshll.u32 %v234, 16
      %v308 = vrot.slane %v306, 5
      %v309 = vor.u32 %v305, %v308
      %v310 = vrot.slane %v309, 4
      %v312 = vshll.u32 %v235, 16
      %v314 = vrot.slane %v312, 5
      %v315 = vsel %vm259, %v310, %v314
      %v317 = vshrl.u32 %v236, 16
      %v319 = vrot.slane %v317, 4
      %v320 = vshll.u32 %v236, 16
      %v322 = vrot.slane %v320, 5
      %v323 = vor.u32 %v319, %v322
      %v324 = vrot.slane %v323, 4
      %v326 = vshll.u32 %v237, 16
      %v328 = vrot.slane %v326, 5
      %v329 = vsel %vm259, %v324, %v328
      %v331 = vshrl.u32 %v238, 16
      %v333 = vrot.slane %v331, 4
      %v334 = vshll.u32 %v238, 16
      %v336 = vrot.slane %v334, 5
      %v337 = vor.u32 %v333, %v336
      %v338 = vrot.slane %v337, 4
      %v340 = vshll.u32 %v239, 16
      %v342 = vrot.slane %v340, 5
      %v343 = vsel %vm259, %v338, %v342
      %v345 = vshrl.u32 %v240, 16
      %v347 = vrot.slane %v345, 4
      %v348 = vshll.u32 %v240, 16
      %v350 = vrot.slane %v348, 5
      %v351 = vor.u32 %v347, %v350
      %v352 = vrot.slane %v351, 4
      %v354 = vshll.u32 %v241, 16
      %v356 = vrot.slane %v354, 5
      %v357 = vsel %vm259, %v352, %v356
      %v359 = vshrl.u32 %v242, 16
      %v361 = vrot.slane %v359, 4
      %v362 = vshll.u32 %v242, 16
      %v364 = vrot.slane %v362, 5
      %v365 = vor.u32 %v361, %v364
      %v366 = vrot.slane %v365, 4
      %v368 = vshll.u32 %v243, 16
      %v370 = vrot.slane %v368, 5
      %v371 = vsel %vm259, %v366, %v370
      %372 = vrot.lane.b32.xlu0 %v273, 8
      %v373 = vpop.permute.xlu0 %372
      %374 = vrot.lane.b32.xlu0 %v287, 8
      %v375 = vpop.permute.xlu0 %374
      %376 = vrot.lane.b32.xlu0 %v301, 8
      %v377 = vpop.permute.xlu0 %376
      %378 = vrot.lane.b32.xlu0 %v315, 8
      %v379 = vpop.permute.xlu0 %378
      %380 = vrot.lane.b32.xlu0 %v329, 8
      %v381 = vpop.permute.xlu0 %380
      %382 = vrot.lane.b32.xlu0 %v343, 8
      %v383 = vpop.permute.xlu0 %382
      %384 = vrot.lane.b32.xlu0 %v357, 8
      %v385 = vpop.permute.xlu0 %384
      %386 = vrot.lane.b32.xlu0 %v371, 8
      %v387 = vpop.permute.xlu0 %386
      %vm396 = vcmask 126016
      %397 = vst.msk [vmem:[#allocation2] sm:$0xf] %vm396, %v373
      %398 = vst.msk [vmem:[#allocation2 + $0x4] sm:$0xf] %vm396, %v375
      %399 = vst.msk [vmem:[#allocation2 + $0x8] sm:$0xf] %vm396, %v377
      %400 = vst.msk [vmem:[#allocation2 + $0xc] sm:$0xf] %vm396, %v379
      %401 = vst.msk [vmem:[#allocation2 + $0x10] sm:$0xf] %vm396, %v381
      %402 = vst.msk [vmem:[#allocation2 + $0x14] sm:$0xf] %vm396, %v383
      %403 = vst.msk [vmem:[#allocation2 + $0x18] sm:$0xf] %vm396, %v385
      %404 = vst.msk [vmem:[#allocation2 + $0x1c] sm:$0xf] %vm396, %v387
      %vm421 = vcmask 1042432
      %vm422 = vcmask 1046532
      %vm423 = vmor %vm421, %vm422
      %v424 = vrot.slane %v228, 5
      %v425 = vrot.slane %v424, 4
      %v426 = vrot.slane %v229, 5
      %v427 = vsel %vm423, %v425, %v426
      %v428 = vrot.slane %v230, 5
      %v429 = vrot.slane %v428, 4
      %v430 = vrot.slane %v231, 5
      %v431 = vsel %vm423, %v429, %v430
      %v432 = vrot.slane %v232, 5
      %v433 = vrot.slane %v432, 4
      %v434 = vrot.slane %v233, 5
      %v435 = vsel %vm423, %v433, %v434
      %v436 = vrot.slane %v234, 5
      %v437 = vrot.slane %v436, 4
      %v438 = vrot.slane %v235, 5
      %v439 = vsel %vm423, %v437, %v438
      %v440 = vrot.slane %v236, 5
      %v441 = vrot.slane %v440, 4
      %v442 = vrot.slane %v237, 5
      %v443 = vsel %vm423, %v441, %v442
      %v444 = vrot.slane %v238, 5
      %v445 = vrot.slane %v444, 4
      %v446 = vrot.slane %v239, 5
      %v447 = vsel %vm423, %v445, %v446
      %v448 = vrot.slane %v240, 5
      %v449 = vrot.slane %v448, 4
      %v450 = vrot.slane %v241, 5
      %v451 = vsel %vm423, %v449, %v450
      %v452 = vrot.slane %v242, 5
      %v453 = vrot.slane %v452, 4
      %v454 = vrot.slane %v243, 5
      %v455 = vsel %vm423, %v453, %v454
      %456 = vrot.lane.b32.xlu0 %v427, 16
      %v457 = vpop.permute.xlu0 %456
      %458 = vrot.lane.b32.xlu0 %v431, 16
      %v459 = vpop.permute.xlu0 %458
      %460 = vrot.lane.b32.xlu0 %v435, 16
      %v461 = vpop.permute.xlu0 %460
      %462 = vrot.lane.b32.xlu0 %v439, 16
      %v463 = vpop.permute.xlu0 %462
      %464 = vrot.lane.b32.xlu0 %v443, 16
      %v465 = vpop.permute.xlu0 %464
      %466 = vrot.lane.b32.xlu0 %v447, 16
      %v467 = vpop.permute.xlu0 %466
      %468 = vrot.lane.b32.xlu0 %v451, 16
      %v469 = vpop.permute.xlu0 %468
      %470 = vrot.lane.b32.xlu0 %v455, 16
      %v471 = vpop.permute.xlu0 %470
      %vm480 = vcmask 191616
      %481 = vst.msk [vmem:[#allocation2] sm:$0xf] %vm480, %v457
      %482 = vst.msk [vmem:[#allocation2 + $0x4] sm:$0xf] %vm480, %v459
      %483 = vst.msk [vmem:[#allocation2 + $0x8] sm:$0xf] %vm480, %v461
      %484 = vst.msk [vmem:[#allocation2 + $0xc] sm:$0xf] %vm480, %v463
      %485 = vst.msk [vmem:[#allocation2 + $0x10] sm:$0xf] %vm480, %v465
      %486 = vst.msk [vmem:[#allocation2 + $0x14] sm:$0xf] %vm480, %v467
      %487 = vst.msk [vmem:[#allocation2 + $0x18] sm:$0xf] %vm480, %v469
      %488 = vst.msk [vmem:[#allocation2 + $0x1c] sm:$0xf] %vm480, %v471
      %490 = vrot.lane.b32.xlu0 %v230, 24
      %v491 = vpop.permute.xlu0 %490
      %492 = vrot.lane.b32.xlu0 %v232, 24
      %v493 = vpop.permute.xlu0 %492
      %494 = vrot.lane.b32.xlu0 %v234, 24
      %v495 = vpop.permute.xlu0 %494
      %496 = vrot.lane.b32.xlu0 %v236, 24
      %v497 = vpop.permute.xlu0 %496
      %498 = vrot.lane.b32.xlu0 %v238, 24
      %v499 = vpop.permute.xlu0 %498
      %500 = vrot.lane.b32.xlu0 %v240, 24
      %v501 = vpop.permute.xlu0 %500
      %502 = vrot.lane.b32.xlu0 %v242, 24
      %v503 = vpop.permute.xlu0 %502
      %504 = vrot.lane.b32.xlu0 %v244, 24
      %v505 = vpop.permute.xlu0 %504
      %vm514 = vcmask 257216
      %515 = vst.msk [vmem:[#allocation2] sm:$0xf] %vm514, %v491
      %516 = vst.msk [vmem:[#allocation2 + $0x4] sm:$0xf] %vm514, %v493
      %517 = vst.msk [vmem:[#allocation2 + $0x8] sm:$0xf] %vm514, %v495
      %518 = vst.msk [vmem:[#allocation2 + $0xc] sm:$0xf] %vm514, %v497
      %519 = vst.msk [vmem:[#allocation2 + $0x10] sm:$0xf] %vm514, %v499
      %520 = vst.msk [vmem:[#allocation2 + $0x14] sm:$0xf] %vm514, %v501
      %521 = vst.msk [vmem:[#allocation2 + $0x18] sm:$0xf] %vm514, %v503
      %522 = vst.msk [vmem:[#allocation2 + $0x1c] sm:$0xf] %vm514, %v505
      %v524 = vshrl.u32 %v244, 16
      %v526 = vrot.slane %v524, 4
      %v527 = vshll.u32 %v244, 16
      %v529 = vrot.slane %v527, 5
      %v530 = vor.u32 %v526, %v529
      %v531 = vrot.slane %v530, 4
      %v533 = vshll.u32 %v245, 16
      %v535 = vrot.slane %v533, 5
      %v536 = vsel %vm259, %v531, %v535
      %537 = vrot.lane.b32.xlu0 %v287, 32
      %v538 = vpop.permute.xlu0 %537
      %539 = vrot.lane.b32.xlu0 %v301, 32
      %v540 = vpop.permute.xlu0 %539
      %541 = vrot.lane.b32.xlu0 %v315, 32
      %v542 = vpop.permute.xlu0 %541
      %543 = vrot.lane.b32.xlu0 %v329, 32
      %v544 = vpop.permute.xlu0 %543
      %545 = vrot.lane.b32.xlu0 %v343, 32
      %v546 = vpop.permute.xlu0 %545
      %547 = vrot.lane.b32.xlu0 %v357, 32
      %v548 = vpop.permute.xlu0 %547
      %549 = vrot.lane.b32.xlu0 %v371, 32
      %v550 = vpop.permute.xlu0 %549
      %551 = vrot.lane.b32.xlu0 %v536, 32
      %v552 = vpop.permute.xlu0 %551
      %vm561 = vcmask 322816
      %562 = vst.msk [vmem:[#allocation2] sm:$0xf] %vm561, %v538
      %563 = vst.msk [vmem:[#allocation2 + $0x4] sm:$0xf] %vm561, %v540
      %564 = vst.msk [vmem:[#allocation2 + $0x8] sm:$0xf] %vm561, %v542
      %565 = vst.msk [vmem:[#allocation2 + $0xc] sm:$0xf] %vm561, %v544
      %566 = vst.msk [vmem:[#allocation2 + $0x10] sm:$0xf] %vm561, %v546
      %567 = vst.msk [vmem:[#allocation2 + $0x14] sm:$0xf] %vm561, %v548
      %568 = vst.msk [vmem:[#allocation2 + $0x18] sm:$0xf] %vm561, %v550
      %569 = vst.msk [vmem:[#allocation2 + $0x1c] sm:$0xf] %vm561, %v552
      %v571 = vrot.slane %v244, 5
      %v572 = vrot.slane %v571, 4
      %v573 = vrot.slane %v245, 5
      %v574 = vsel %vm423, %v572, %v573
      %575 = vrot.lane.b32.xlu0 %v431, 40
      %v576 = vpop.permute.xlu0 %575
      %577 = vrot.lane.b32.xlu0 %v435, 40
      %v578 = vpop.permute.xlu0 %577
      %579 = vrot.lane.b32.xlu0 %v439, 40
      %v580 = vpop.permute.xlu0 %579
      %581 = vrot.lane.b32.xlu0 %v443, 40
      %v582 = vpop.permute.xlu0 %581
      %583 = vrot.lane.b32.xlu0 %v447, 40
      %v584 = vpop.permute.xlu0 %583
      %585 = vrot.lane.b32.xlu0 %v451, 40
      %v586 = vpop.permute.xlu0 %585
      %587 = vrot.lane.b32.xlu0 %v455, 40
      %v588 = vpop.permute.xlu0 %587
      %589 = vrot.lane.b32.xlu0 %v574, 40
      %v590 = vpop.permute.xlu0 %589
      %vm599 = vcmask 388416
      %600 = vst.msk [vmem:[#allocation2] sm:$0xf] %vm599, %v576
      %601 = vst.msk [vmem:[#allocation2 + $0x4] sm:$0xf] %vm599, %v578
      %602 = vst.msk [vmem:[#allocation2 + $0x8] sm:$0xf] %vm599, %v580
      %603 = vst.msk [vmem:[#allocation2 + $0xc] sm:$0xf] %vm599, %v582
      %604 = vst.msk [vmem:[#allocation2 + $0x10] sm:$0xf] %vm599, %v584
      %605 = vst.msk [vmem:[#allocation2 + $0x14] sm:$0xf] %vm599, %v586
      %606 = vst.msk [vmem:[#allocation2 + $0x18] sm:$0xf] %vm599, %v588
      %607 = vst.msk [vmem:[#allocation2 + $0x1c] sm:$0xf] %vm599, %v590
      %609 = vrot.lane.b32.xlu0 %v232, 48
      %v610 = vpop.permute.xlu0 %609
      %611 = vrot.lane.b32.xlu0 %v234, 48
      %v612 = vpop.permute.xlu0 %611
      %613 = vrot.lane.b32.xlu0 %v236, 48
      %v614 = vpop.permute.xlu0 %613
      %615 = vrot.lane.b32.xlu0 %v238, 48
      %v616 = vpop.permute.xlu0 %615
      %617 = vrot.lane.b32.xlu0 %v240, 48
      %v618 = vpop.permute.xlu0 %617
      %619 = vrot.lane.b32.xlu0 %v242, 48
      %v620 = vpop.permute.xlu0 %619
      %621 = vrot.lane.b32.xlu0 %v244, 48
      %v622 = vpop.permute.xlu0 %621
      %623 = vrot.lane.b32.xlu0 %v246, 48
      %v624 = vpop.permute.xlu0 %623
      %vm633 = vcmask 454016
      %634 = vst.msk [vmem:[#allocation2] sm:$0xf] %vm633, %v610
      %635 = vst.msk [vmem:[#allocation2 + $0x4] sm:$0xf] %vm633, %v612
      %636 = vst.msk [vmem:[#allocation2 + $0x8] sm:$0xf] %vm633, %v614
      %637 = vst.msk [vmem:[#allocation2 + $0xc] sm:$0xf] %vm633, %v616
      %638 = vst.msk [vmem:[#allocation2 + $0x10] sm:$0xf] %vm633, %v618
      %639 = vst.msk [vmem:[#allocation2 + $0x14] sm:$0xf] %vm633, %v620
      %640 = vst.msk [vmem:[#allocation2 + $0x18] sm:$0xf] %vm633, %v622
      %641 = vst.msk [vmem:[#allocation2 + $0x1c] sm:$0xf] %vm633, %v624
      %v643 = vshrl.u32 %v246, 16
      %v645 = vrot.slane %v643, 4
      %v646 = vshll.u32 %v246, 16
      %v648 = vrot.slane %v646, 5
      %v649 = vor.u32 %v645, %v648
      %v650 = vrot.slane %v649, 4
      %v652 = vshll.u32 %v247, 16
      %v654 = vrot.slane %v652, 5
      %v655 = vsel %vm259, %v650, %v654
      %656 = vrot.lane.b32.xlu0 %v301, 56
      %v657 = vpop.permute.xlu0 %656
      %658 = vrot.lane.b32.xlu0 %v315, 56
      %v659 = vpop.permute.xlu0 %658
      %660 = vrot.lane.b32.xlu0 %v329, 56
      %v661 = vpop.permute.xlu0 %660
      %662 = vrot.lane.b32.xlu0 %v343, 56
      %v663 = vpop.permute.xlu0 %662
      %664 = vrot.lane.b32.xlu0 %v357, 56
      %v665 = vpop.permute.xlu0 %664
      %666 = vrot.lane.b32.xlu0 %v371, 56
      %v667 = vpop.permute.xlu0 %666
      %668 = vrot.lane.b32.xlu0 %v536, 56
      %v669 = vpop.permute.xlu0 %668
      %670 = vrot.lane.b32.xlu0 %v655, 56
      %v671 = vpop.permute.xlu0 %670
      %vm680 = vcmask 519616
      %681 = vst.msk [vmem:[#allocation2] sm:$0xf] %vm680, %v657
      %682 = vst.msk [vmem:[#allocation2 + $0x4] sm:$0xf] %vm680, %v659
      %683 = vst.msk [vmem:[#allocation2 + $0x8] sm:$0xf] %vm680, %v661
      %684 = vst.msk [vmem:[#allocation2 + $0xc] sm:$0xf] %vm680, %v663
      %685 = vst.msk [vmem:[#allocation2 + $0x10] sm:$0xf] %vm680, %v665
      %686 = vst.msk [vmem:[#allocation2 + $0x14] sm:$0xf] %vm680, %v667
      %687 = vst.msk [vmem:[#allocation2 + $0x18] sm:$0xf] %vm680, %v669
      %688 = vst.msk [vmem:[#allocation2 + $0x1c] sm:$0xf] %vm680, %v671
      %v690 = vrot.slane %v246, 5
      %v691 = vrot.slane %v690, 4
      %v692 = vrot.slane %v247, 5
      %v693 = vsel %vm423, %v691, %v692
      %694 = vrot.lane.b32.xlu0 %v435, 64
      %v695 = vpop.permute.xlu0 %694
      %696 = vrot.lane.b32.xlu0 %v439, 64
      %v697 = vpop.permute.xlu0 %696
      %698 = vrot.lane.b32.xlu0 %v443, 64
      %v699 = vpop.permute.xlu0 %698
      %700 = vrot.lane.b32.xlu0 %v447, 64
      %v701 = vpop.permute.xlu0 %700
      %702 = vrot.lane.b32.xlu0 %v451, 64
      %v703 = vpop.permute.xlu0 %702
      %704 = vrot.lane.b32.xlu0 %v455, 64
      %v705 = vpop.permute.xlu0 %704
      %706 = vrot.lane.b32.xlu0 %v574, 64
      %v707 = vpop.permute.xlu0 %706
      %708 = vrot.lane.b32.xlu0 %v693, 64
      %v709 = vpop.permute.xlu0 %708
      %vm718 = vcmask 585216
      %719 = vst.msk [vmem:[#allocation2] sm:$0xf] %vm718, %v695
      %720 = vst.msk [vmem:[#allocation2 + $0x4] sm:$0xf] %vm718, %v697
      %721 = vst.msk [vmem:[#allocation2 + $0x8] sm:$0xf] %vm718, %v699
      %722 = vst.msk [vmem:[#allocation2 + $0xc] sm:$0xf] %vm718, %v701
      %723 = vst.msk [vmem:[#allocation2 + $0x10] sm:$0xf] %vm718, %v703
      %724 = vst.msk [vmem:[#allocation2 + $0x14] sm:$0xf] %vm718, %v705
      %725 = vst.msk [vmem:[#allocation2 + $0x18] sm:$0xf] %vm718, %v707
      %726 = vst.msk [vmem:[#allocation2 + $0x1c] sm:$0xf] %vm718, %v709
      %v727 = vld [vmem:[#allocation2] sm:$0xf]
      %v728 = vld [vmem:[#allocation2 + $0x4] sm:$0xf]
      %v729 = vld [vmem:[#allocation2 + $0x8] sm:$0xf]
      %v730 = vld [vmem:[#allocation2 + $0xc] sm:$0xf]
      %v731 = vld [vmem:[#allocation2 + $0x10] sm:$0xf]
      %v732 = vld [vmem:[#allocation2 + $0x14] sm:$0xf]
      %v733 = vld [vmem:[#allocation2 + $0x18] sm:$0xf]
      %v734 = vld [vmem:[#allocation2 + $0x1c] sm:$0xf]
      %v735 = vld [vmem:[%s1] sm:$0xf]
      %v736 = vld [vmem:[%s1 + $0x4] sm:$0xf]
      %v737 = vld [vmem:[%s1 + $0x8] sm:$0xf]
      %v738 = vld [vmem:[%s1 + $0xc] sm:$0xf]
      %v739 = vld [vmem:[%s1 + $0x10] sm:$0xf]
      %v740 = vld [vmem:[%s1 + $0x14] sm:$0xf]
      %v741 = vld [vmem:[%s1 + $0x18] sm:$0xf]
      %v742 = vld [vmem:[%s1 + $0x1c] sm:$0xf]
      %v743 = vld [vmem:[%s1 + $0x20] sm:$0xf]
      %v744 = vld [vmem:[%s2] sm:$0x1]
      %v746 = vlaneseq
      %v747 = vshrl.u32 %v746, 7
      %v748 = vsub.s32 0, %v747
      %v749 = vrot.slane %v744, %v748
      %v759 = vunpack.c.l.b16 %v727
      %v760 = vunpack.c.l.b16 %v728
      %v761 = vunpack.c.l.b16 %v729
      %v762 = vunpack.c.l.b16 %v730
      %v763 = vunpack.c.l.b16 %v731
      %v764 = vunpack.c.l.b16 %v732
      %v765 = vunpack.c.l.b16 %v733
      %v766 = vunpack.c.l.b16 %v734
      %v767 = vpack.c.b16 %v760, %v759
      %v768 = vpack.c.b16 %v762, %v761
      %v769 = vpack.c.b16 %v764, %v763
      %v770 = vpack.c.b16 %v766, %v765
      %v780 = vunpack.c.l.b16 %v735
      %v781 = vunpack.c.l.b16 %v736
      %v782 = vunpack.c.l.b16 %v737
      %v783 = vunpack.c.l.b16 %v738
      %v784 = vunpack.c.l.b16 %v739
      %v785 = vunpack.c.l.b16 %v740
      %v786 = vunpack.c.l.b16 %v741
      %v787 = vunpack.c.l.b16 %v742
      %v788 = vunpack.c.l.b16 %v743
      %v789 = vpack.c.b16 %v781, %v780
      %v790 = vpack.c.b16 %v783, %v782
      %v791 = vpack.c.b16 %v785, %v784
      %v792 = vpack.c.b16 %v787, %v786
      %v793 = vpack.c.b16 %v788, %v788
      %vm798 = vcmask 588800
      %v800 = vsel %vm798, %v767, 0
      %v803 = vsel %vm798, %v768, 0
      %v806 = vsel %vm798, %v769, 0
      %v809 = vsel %vm798, %v770, 0
      %vm811 = vcmask 1043456
      %v813 = vsel %vm811, %v793, 0
      %815 = vmatprep.subr.bf16.mxu0 0
      %816 = vmatpush1.bf16.msra.mxu0 0
      %817 = vmatprep.subr.bf16.mxu0 0
      %818 = vmatpush1.bf16.msra.mxu0 0
      %819 = vmatprep.subr.bf16.mxu0 0
      %820 = vmatpush1.bf16.msra.mxu0 0
      %821 = vmatprep.subr.bf16.mxu0 0
      %822 = vmatpush1.bf16.msra.mxu0 %v813
      %823 = vmatprep.subr.bf16.mxu0 0
      %824 = vmatpush1.bf16.msra.mxu0 %v792
      %825 = vmatprep.subr.bf16.mxu0 0
      %826 = vmatpush1.bf16.msra.mxu0 %v791
      %827 = vmatprep.subr.bf16.mxu0 0
      %828 = vmatpush1.bf16.msra.mxu0 %v790
      %829 = vmatprep.subr.bf16.mxu0 0
      %830 = vmatpush1.bf16.msra.mxu0 %v789
      %831 = vmatprep.subr.bf16.mxu0 0
      %832 = vmatpush2.bf16.msra.mxu0 0
      %833 = vmatprep.subr.bf16.mxu0 0
      %834 = vmatpush2.bf16.msra.mxu0 0
      %835 = vmatprep.subr.bf16.mxu0 0
      %836 = vmatpush2.bf16.msra.mxu0 0
      %837 = vmatprep.subr.bf16.mxu0 0
      %838 = vmatpush2.bf16.msra.mxu0 0
      %839 = vmatprep.subr.bf16.mxu0 0
      %840 = vmatpush2.bf16.msra.mxu0 0
      %841 = vmatprep.subr.bf16.mxu0 0
      %842 = vmatpush2.bf16.msra.mxu0 0
      %843 = vmatprep.subr.bf16.mxu0 0
      %844 = vmatpush2.bf16.msra.mxu0 0
      %845 = vmatprep.subr.bf16.mxu0 0
      %846 = vmatpush2.bf16.msra.mxu0 0
      %847 = vmatprep.mubr.bf16.mxu0 0
      %848 = vmatmul.mubr.bf16.gmra.mxu0 %v800
      %v849 = vpop.f32.mrf.mxu0
      %v850 = vadd.f32 %v749, %v849
      %v851 = vpop.f32.mrf.mxu0
      %v852 = vpop.f32.mrf.mxu0
      %v853 = vadd.f32 %v749, %v852
      %v854 = vpop.f32.mrf.mxu0
      %855 = vmatprep.mubr.bf16.mxu0 0
      %856 = vmatmul.mubr.bf16.gmra.mxu0 %v803
      %v857 = vpop.f32.mrf.mxu0
      %v858 = vadd.f32 %v749, %v857
      %v859 = vpop.f32.mrf.mxu0
      %v860 = vpop.f32.mrf.mxu0
      %v861 = vadd.f32 %v749, %v860
      %v862 = vpop.f32.mrf.mxu0
      %863 = vmatprep.mubr.bf16.mxu0 0
      %864 = vmatmul.mubr.bf16.gmra.mxu0 %v806
      %v865 = vpop.f32.mrf.mxu0
      %v866 = vadd.f32 %v749, %v865
      %v867 = vpop.f32.mrf.mxu0
      %v868 = vpop.f32.mrf.mxu0
      %v869 = vadd.f32 %v749, %v868
      %v870 = vpop.f32.mrf.mxu0
      %871 = vmatprep.mubr.bf16.mxu0 0
      %872 = vmatmul.mubr.bf16.gmra.mxu0 %v809
      %v873 = vpop.f32.mrf.mxu0
      %v874 = vadd.f32 %v749, %v873
      %v875 = vpop.f32.mrf.mxu0
      %v876 = vpop.f32.mrf.mxu0
      %v877 = vadd.f32 %v749, %v876
      %v878 = vpop.f32.mrf.mxu0
      %879 = vdwg.mxu0
      %v880 = vld [vmem:[%s4] sm:$0x1]
      %vm881 = vcmask 523264
      %v882 = vsel %vm881, %v850, 0.0
      %v883 = vsel %vm881, %v853, 0.0
      %v884 = vadd.f32 %v882, %v883
      %v885 = vsel %vm881, %v858, 0.0
      %v886 = vadd.f32 %v884, %v885
      %v887 = vsel %vm881, %v861, 0.0
      %v888 = vadd.f32 %v886, %v887
      %v889 = vsel %vm881, %v866, 0.0
      %v890 = vadd.f32 %v888, %v889
      %v891 = vsel %vm881, %v869, 0.0
      %v892 = vadd.f32 %v890, %v891
      %v893 = vsel %vm881, %v874, 0.0
      %v894 = vadd.f32 %v892, %v893
      %v895 = vsel %vm881, %v877, 0.0
      %v896 = vadd.f32 %v894, %v895
      %v897 = vrot.slane %v896, 4
      %v898 = vadd.f32 %v896, %v897
      %v899 = vrot.slane %v898, 2
      %v900 = vadd.f32 %v898, %v899
      %v901 = vrot.slane %v900, 1
      %v902 = vadd.f32 %v900, %v901
      %v903 = vadd.f32 %v880, %v902
      %vm904 = vcmask 516096
      %905 = vst.msk [vmem:[%s4] sm:$0x1] %vm904, %v903
      %v906 = vld [vmem:[%s5] sm:$0x1]
      %v907 = vmul.f32 %v850, %v850
      %v908 = vmul.f32 %v853, %v853
      %v909 = vmul.f32 %v858, %v858
      %v910 = vmul.f32 %v861, %v861
      %v911 = vmul.f32 %v866, %v866
      %v912 = vmul.f32 %v869, %v869
      %v913 = vmul.f32 %v874, %v874
      %v914 = vmul.f32 %v877, %v877
      %v915 = vsel %vm881, %v907, 0.0
      %v916 = vsel %vm881, %v908, 0.0
      %v917 = vadd.f32 %v915, %v916
      %v918 = vsel %vm881, %v909, 0.0
      %v919 = vadd.f32 %v917, %v918
      %v920 = vsel %vm881, %v910, 0.0
      %v921 = vadd.f32 %v919, %v920
      %v922 = vsel %vm881, %v911, 0.0
      %v923 = vadd.f32 %v921, %v922
      %v924 = vsel %vm881, %v912, 0.0
      %v925 = vadd.f32 %v923, %v924
      %v926 = vsel %vm881, %v913, 0.0
      %v927 = vadd.f32 %v925, %v926
      %v928 = vsel %vm881, %v914, 0.0
      %v929 = vadd.f32 %v927, %v928
      %v930 = vrot.slane %v929, 4
      %v931 = vadd.f32 %v929, %v930
      %v932 = vrot.slane %v931, 2
      %v933 = vadd.f32 %v931, %v932
      %v934 = vrot.slane %v933, 1
      %v935 = vadd.f32 %v933, %v934
      %v936 = vadd.f32 %v906, %v935
      %937 = vst.msk [vmem:[%s5] sm:$0x1] %vm904, %v936
      %938 = vst.msk [vmem:[%s219] sm:$0xff] %vm881, %v850
      %939 = vst.msk [vmem:[%s219 + $0x8] sm:$0xff] %vm881, %v853
      %940 = vst.msk [vmem:[%s219 + $0x10] sm:$0xff] %vm881, %v858
      %941 = vst.msk [vmem:[%s219 + $0x18] sm:$0xff] %vm881, %v861
      %942 = vst.msk [vmem:[%s219 + $0x20] sm:$0xff] %vm881, %v866
      %943 = vst.msk [vmem:[%s219 + $0x28] sm:$0xff] %vm881, %v869
      %944 = vst.msk [vmem:[%s219 + $0x30] sm:$0xff] %vm881, %v874
      %945 = vst.msk [vmem:[%s219 + $0x38] sm:$0xff] %vm881, %v877
      %p946 = scmp.lt.s32.totalorder %s17, 1
      %s947 = scalar_select %p946, %s17, 1
      %s948 = smul.addr %s947, 8
      %s949 = smul.addr %s948, 8
      %s950 = scalar_lea.vmem %s3, %s949
      // Predicated region
      $region37: #{decoder_block.2} parent=31 // pred_check
        %p951 = pneg %p103
      $region38: #{decoder_block.2} parent=31 // pred_check_branch
        %953 = sbr.rel (%p951) target = $region40
      $region39: #{decoder_block.2} parent=31 // pred_region
        _
      $region40: #{decoder_block.2} parent=31 // pred_fallthru
        _
      // Predicated region
      $region41: #{decoder_block.2} parent=31 // pred_check
        %p954 = pneg %p124
      $region42: #{decoder_block.2} parent=31 // pred_check_branch
        %956 = sbr.rel (%p954) target = $region44
      $region43: #{decoder_block.2} parent=31 // pred_region
        _
      $region44: #{decoder_block.2} parent=31 // pred_fallthru
        _
      // Predicated region
      $region45: #{decoder_block.2} parent=31 // pred_check
        %p957 = pneg %p145
      $region46: #{decoder_block.2} parent=31 // pred_check_branch
        %959 = sbr.rel (%p957) target = $region48
      $region47: #{decoder_block.2} parent=31 // pred_region
        _
      $region48: #{decoder_block.2} parent=31 // pred_fallthru
        _
      // Predicated region
      $region49: #{decoder_block.2} parent=31 // pred_check
        %p960 = pneg %p124
      $region50: #{decoder_block.2} parent=31 // pred_check_branch
        %962 = sbr.rel (%p960) target = $region52
      $region51: #{decoder_block.2} parent=31 // pred_region
        _
      $region52: #{decoder_block.2} parent=31 // pred_fallthru
        _
      // Predicated region
      $region53: #{decoder_block.2} parent=31 // pred_check
        %p963 = pneg %p145
      $region54: #{decoder_block.2} parent=31 // pred_check_branch
        %965 = sbr.rel (%p963) target = $region56
      $region55: #{decoder_block.2} parent=31 // pred_region
        _
      $region56: #{decoder_block.2} parent=31 // pred_fallthru
        _
    $region32: #{decoder_block.2} parent=5 // pred_fallthru
      _
    %p966 = scmp.le.s32.totalorder 2, %s12
    // Predicated region
    $region57: #{decoder_block.2} parent=5 // pred_check
      %p967 = pneg %p966
    $region58: #{decoder_block.2} parent=5 // pred_check_branch
      %969 = sbr.rel (%p967) target = $region60
    $region59: #{decoder_block.2} parent=5 // pred_region
      %s970 = ssub.s32 %s12, 2
      // Predicated region
      $region61: #{decoder_block.2} parent=59 // pred_check
        %p971 = pneg %p109
      $region62: #{decoder_block.2} parent=59 // pred_check_branch
        %973 = sbr.rel (%p971) target = $region64
      $region63: #{decoder_block.2} parent=59 // pred_region
        %p974 = scmp.lt.s32.totalorder %s18, 1
        %s975 = scalar_select %p974, %s18, 1
        %s976 = smul.addr %s975, 8
        %s977 = smul.addr %s976, 8
        %s978 = scalar_lea.vmem %s3, %s977
      $region64: #{decoder_block.2} parent=59 // pred_fallthru
        _
    $region60: #{decoder_block.2} parent=5 // pred_fallthru
      _
  $region6: #{decoder_block.2} parent=0 // loop_footer
    %s16 = sadd.s32 1, %s12
  $region7: #{decoder_block.2} parent=0 // loop_footer_branch
    %11 = sbr.rel target = $region3
  $region8: #{decoder_block.2} parent=0 // loop_exit
    _

</llo_original>
